<compile_context>
chip_gen: v7x
topology: tpu7x:2x2x1
jax: 0.10.0
libtpu: 0.0.40
codegen_flags: <defaults>
</compile_context>

<pallas_src>
import jax
import jax.numpy as jnp
from jax.experimental import pallas as pl
from jax.experimental.pallas import tpu as pltpu

# ----------------------------- small config (consistent with NMT args) -------
VOCAB   = 64   # args.cn_vocab_size
EMB     = 32   # args.embedding_size
HID     = 32   # args.hidden_size
SRC_LEN = 8
TGT_LEN = 6
BATCH   = 2
PAD_ID  = 0    # args.cn_vocab.stoi['<pad>']

V_PAD   = 128      # lane-dense padded vocab width for the output slab
NEG_INF = -1e30    # bias for pad vocab columns (kills them in log_softmax)


# ----------------------------- Pallas kernel ----------------------------------
def _nmt_decode_kernel(y_emb_ref, enc_ref, wih_emb_t_ref, w_rec_t_ref,
                       b_lstm_ref, wsrc_t_ref, wav_h_t_ref, wav_c_t_ref,
                       wro_t_ref, bro_ref, logp_ref):
    """Entire decode (all T steps) in one invocation; everything VMEM-resident."""
    B, S, H2 = enc_ref.shape
    H = H2 // 2
    TB = y_emb_ref.shape[0]
    T = TB // B

    enc = enc_ref[...]                                              # (B, S, 2H)

    # Non-recurrent half of the LSTM gates for all steps (+ combined bias):
    # one matmul replaces the former standalone linear_nobias pallas_call.
    x_gates_all = (jnp.dot(y_emb_ref[...], wih_emb_t_ref[...],
                           preferred_element_type=jnp.float32)
                   + b_lstm_ref[...])                               # (T*B, 4H)

    # tensor_transform(att_src_linear, src_encodings): one batched matmul.
    att_lin = jnp.dot(enc.reshape(B * S, H2), wsrc_t_ref[...],
                      preferred_element_type=jnp.float32).reshape(B, S, H)

    w_rec_t = w_rec_t_ref[...]                                      # (2H, 4H)
    wav_h_t = wav_h_t_ref[...]                                      # (H, H)
    wav_c_t = wav_c_t_ref[...]                                      # (2H, H)

    # Recurrent state: ah = [att_tm1 ; h_tm1] (one fused recurrent matmul),
    # c = cell state.  Decoder init state == zeros (encoder init not available).
    ah = jnp.zeros((B, 2 * H), jnp.float32)
    c = jnp.zeros((B, H), jnp.float32)
    att_steps = []

    # Fully unrolled static time loop (T is a compile-time constant): no grid
    # step overhead, no per-step DMAs, scheduler sees across steps.
    for t in range(T):
        # ---- LSTM cell (PyTorch gate order i, f, g, o) -----------------------
        gates = (x_gates_all[t * B:(t + 1) * B]
                 + jnp.dot(ah, w_rec_t, preferred_element_type=jnp.float32))
        i = jax.nn.sigmoid(gates[:, 0 * H:1 * H])
        f = jax.nn.sigmoid(gates[:, 1 * H:2 * H])
        g = jnp.tanh(gates[:, 2 * H:3 * H])
        o = jax.nn.sigmoid(gates[:, 3 * H:4 * H])
        c = f * c + i * g
        h = o * jnp.tanh(c)

        # ---- dot_prod_attention (softmax over lane axis S) -------------------
        scores = jnp.sum(att_lin * h[:, None, :], axis=-1)          # (B, S)
        m = jnp.max(scores, axis=-1, keepdims=True)
        e = jnp.exp(scores - m)
        inv = pl.reciprocal(jnp.sum(e, axis=-1, keepdims=True), approx=True)
        ctx = jnp.sum(e[:, :, None] * enc, axis=1) * inv            # (B, 2H)

        # ---- att_t = tanh(att_vec_linear([h ; ctx]))  (split matmul) ---------
        att_t = jnp.tanh(
            jnp.dot(h, wav_h_t, preferred_element_type=jnp.float32)
            + jnp.dot(ctx, wav_c_t, preferred_element_type=jnp.float32))
        att_steps.append(att_t)

        # next-step recurrent input [att_t ; h]
        ah = jnp.concatenate([att_t, h], axis=-1)                   # (B, 2H)

    # ---- batched readout + log_softmax, one lane/sublane-dense store --------
    att_all = jnp.concatenate(att_steps, axis=0)                    # (T*B, H)
    score = jnp.dot(att_all, wro_t_ref[...],
                    preferred_element_type=jnp.float32) + bro_ref[...]
    m2 = jnp.max(score, axis=-1, keepdims=True)
    lse = m2 + jnp.log(jnp.sum(jnp.exp(score - m2), axis=-1, keepdims=True))
    logp_ref[...] = score - lse                                     # (T*B, V_PAD)


# ----------------------------- forward ----------------------------------------
def nmt_forward(params, src_encodings, tgt_ids):
    """
    src_encodings: (src_len, batch, 2*HID)   -- output of the external encoder
    tgt_ids:       (tgt_len, batch) int32    -- target token ids
    returns:       (tgt_len, batch, VOCAB) log-probabilities per decode step
    """
    # TODO(synk): `encoder` / `decoder` submodules are injected and not defined
    # in nmt_model.py; src_encodings is an input and initial (h, c) is zeros.
    S, B, H2 = src_encodings.shape
    H = H2 // 2
    T = tgt_ids.shape[0]
    V = params["W_ro"].shape[0]
    E = params["embedding"].shape[1]
    assert V <= V_PAD

    # ---- hoisted (once-per-forward) weight prep ------------------------------
    W_ih = params["W_ih"]                                 # (4H, EMB+H)
    wih_emb_t = jnp.transpose(W_ih[:, :E])                # (EMB, 4H)
    # fused recurrent weight: rows [0,H) act on att_tm1, rows [H,2H) on h_tm1
    w_rec_t = jnp.transpose(
        jnp.concatenate([W_ih[:, E:], params["W_hh"]], axis=1))   # (2H, 4H)
    b_lstm = (params["b_ih"] + params["b_hh"]).reshape(1, 4 * H)
    wsrc_t = jnp.transpose(params["W_att_src"])           # (2H, H)
    W_av = params["W_att_vec"]                            # (H, 3H), in = [h;ctx]
    wav_h_t = jnp.transpose(W_av[:, :H])                  # (H, H)
    wav_c_t = jnp.transpose(W_av[:, H:])                  # (2H, H)
    wro_t_pad = jnp.pad(jnp.transpose(params["W_ro"]),
                        ((0, 0), (0, V_PAD - V)))         # (H, V_PAD)
    bro_pad = jnp.concatenate(
        [params["b_ro"],
         jnp.full((V_PAD - V,), NEG_INF, jnp.float32)]).reshape(1, V_PAD)

    # embedding lookup for all steps (tiny gather; stays in the XLA wrapper)
    y_emb_all = jnp.take(params["embedding"], tgt_ids.reshape(-1), axis=0)  # (T*B, EMB)

    # batch-major source encodings for attention (one relayout per forward)
    enc_bm = jnp.transpose(src_encodings, (1, 0, 2))      # (B, S, 2H)

    vmem = lambda: pl.BlockSpec(memory_space=pltpu.MemorySpace.VMEM)
    logp_pad = pl.pallas_call(
        _nmt_decode_kernel,
        out_shape=jax.ShapeDtypeStruct((T * B, V_PAD), jnp.float32),
        in_specs=[vmem() for _ in range(10)],
        out_specs=vmem(),
    )(y_emb_all, enc_bm, wih_emb_t, w_rec_t, b_lstm,
      wsrc_t, wav_h_t, wav_c_t, wro_t_pad, bro_pad)

    return logp_pad.reshape(T, B, V_PAD)[:, :, :V]        # (T, B, V)


# ----------------------------- deterministic params ---------------------------
def init_params(key):
    ks = jax.random.split(key, 9)
    initrange = 0.1

    def uni(k, shape, bound):
        return jax.random.uniform(k, shape, jnp.float32, -bound, bound)

    lin_b = lambda fan_in: 1.0 / float(fan_in) ** 0.5
    return {
        # nn.Embedding(cn_vocab_size, embedding_size).uniform_(-0.1, 0.1)
        "embedding": uni(ks[0], (VOCAB, EMB), initrange),
        # nn.Linear(2H, H, bias=False)
        "W_att_src": uni(ks[1], (HID, 2 * HID), lin_b(2 * HID)),
        # nn.Linear(3H, H, bias=False)
        "W_att_vec": uni(ks[2], (HID, 3 * HID), lin_b(3 * HID)),
        # decoder.rnn: LSTM(input=EMB+H, hidden=H)
        "W_ih": uni(ks[3], (4 * HID, EMB + HID), lin_b(HID)),
        "W_hh": uni(ks[4], (4 * HID, HID), lin_b(HID)),
        "b_ih": uni(ks[5], (4 * HID,), lin_b(HID)),
        "b_hh": uni(ks[6], (4 * HID,), lin_b(HID)),
        # decoder.readout: Linear(H, VOCAB)
        "W_ro": uni(ks[7], (VOCAB, HID), lin_b(HID)),
        "b_ro": uni(ks[8], (VOCAB,), lin_b(HID)),
    }


if __name__ == "__main__":
    key = jax.random.PRNGKey(0)
    kp, ke, kt = jax.random.split(key, 3)
    params = init_params(kp)

    src_encodings = jax.random.normal(ke, (SRC_LEN, BATCH, 2 * HID), jnp.float32)
    tgt_ids = jax.random.randint(kt, (TGT_LEN, BATCH), 0, VOCAB, dtype=jnp.int32)

    fwd = jax.jit(nmt_forward)
    scores = fwd(params, src_encodings, tgt_ids)
    jax.block_until_ready(scores)

    assert scores.shape == (TGT_LEN, BATCH, VOCAB)
    # rows of log_softmax must (log-)sum to ~0
    assert bool(jnp.all(jnp.abs(
        jax.scipy.special.logsumexp(scores, axis=-1)) < 1e-3))
    print("KERNEL_OK")
</pallas_src>

<mosaic_0001>
module attributes {stable_mosaic.version = 11 : i64} {
  func.func @_nmt_decode_kernel(%arg0: memref<12x32xf32, #tpu.memory_space<vmem>>, %arg1: memref<2x8x64xf32, #tpu.memory_space<vmem>>, %arg2: memref<32x128xf32, #tpu.memory_space<vmem>>, %arg3: memref<64x128xf32, #tpu.memory_space<vmem>>, %arg4: memref<1x128xf32, #tpu.memory_space<vmem>>, %arg5: memref<64x32xf32, #tpu.memory_space<vmem>>, %arg6: memref<32x32xf32, #tpu.memory_space<vmem>>, %arg7: memref<64x32xf32, #tpu.memory_space<vmem>>, %arg8: memref<32x128xf32, #tpu.memory_space<vmem>>, %arg9: memref<1x128xf32, #tpu.memory_space<vmem>>, %arg10: memref<12x128xf32, #tpu.memory_space<vmem>>) attributes {dimension_semantics = [], scalar_prefetch = 0 : i64, scratch_operands = 0 : i64, tpu.core_type = #tpu.core_type<tc>} {
    %c0 = arith.constant 0 : index
    %c0_0 = arith.constant 0 : index
    %c0_1 = arith.constant 0 : index
    %0 = vector.load %arg1[%c0, %c0_0, %c0_1] : memref<2x8x64xf32, #tpu.memory_space<vmem>>, vector<2x8x64xf32>
    %c0_2 = arith.constant 0 : index
    %c0_3 = arith.constant 0 : index
    %1 = vector.load %arg0[%c0_2, %c0_3] : memref<12x32xf32, #tpu.memory_space<vmem>>, vector<12x32xf32>
    %c0_4 = arith.constant 0 : index
    %c0_5 = arith.constant 0 : index
    %2 = vector.load %arg2[%c0_4, %c0_5] : memref<32x128xf32, #tpu.memory_space<vmem>>, vector<32x128xf32>
    %cst = arith.constant dense<0.000000e+00> : vector<12x128xf32>
    %3 = tpu.matmul %1, %2, %cst {dimension_numbers = #tpu.dot_dimension_numbers<[1], [0], [0], [1], [0, 0, 1, 1], [], []>} : vector<12x32xf32>, vector<32x128xf32>, vector<12x128xf32> -> vector<12x128xf32>
    %c0_6 = arith.constant 0 : index
    %c0_7 = arith.constant 0 : index
    %4 = vector.load %arg4[%c0_6, %c0_7] : memref<1x128xf32, #tpu.memory_space<vmem>>, vector<1x128xf32>
    %5 = vector.broadcast %4 : vector<1x128xf32> to vector<12x128xf32>
    %6 = arith.addf %3, %5 : vector<12x128xf32>
    %7 = vector.shape_cast %0 : vector<2x8x64xf32> to vector<16x64xf32>
    %c0_8 = arith.constant 0 : index
    %c0_9 = arith.constant 0 : index
    %8 = vector.load %arg5[%c0_8, %c0_9] : memref<64x32xf32, #tpu.memory_space<vmem>>, vector<64x32xf32>
    %cst_10 = arith.constant dense<0.000000e+00> : vector<16x32xf32>
    %9 = tpu.matmul %7, %8, %cst_10 {dimension_numbers = #tpu.dot_dimension_numbers<[1], [0], [0], [1], [0, 0, 1, 1], [], []>} : vector<16x64xf32>, vector<64x32xf32>, vector<16x32xf32> -> vector<16x32xf32>
    %10 = vector.shape_cast %9 : vector<16x32xf32> to vector<2x8x32xf32>
    %c0_11 = arith.constant 0 : index
    %c0_12 = arith.constant 0 : index
    %11 = vector.load %arg3[%c0_11, %c0_12] : memref<64x128xf32, #tpu.memory_space<vmem>>, vector<64x128xf32>
    %c0_13 = arith.constant 0 : index
    %c0_14 = arith.constant 0 : index
    %12 = vector.load %arg6[%c0_13, %c0_14] : memref<32x32xf32, #tpu.memory_space<vmem>>, vector<32x32xf32>
    %c0_15 = arith.constant 0 : index
    %c0_16 = arith.constant 0 : index
    %13 = vector.load %arg7[%c0_15, %c0_16] : memref<64x32xf32, #tpu.memory_space<vmem>>, vector<64x32xf32>
    %cst_17 = arith.constant 0.000000e+00 : f32
    %14 = vector.broadcast %cst_17 : f32 to vector<2x64xf32>
    %cst_18 = arith.constant 0.000000e+00 : f32
    %15 = vector.broadcast %cst_18 : f32 to vector<2x32xf32>
    %16 = vector.extract_strided_slice %6 {offsets = [0, 0], sizes = [2, 128], strides = [1, 1]} : vector<12x128xf32> to vector<2x128xf32>
    %cst_19 = arith.constant dense<0.000000e+00> : vector<2x128xf32>
    %17 = tpu.matmul %14, %11, %cst_19 {dimension_numbers = #tpu.dot_dimension_numbers<[1], [0], [0], [1], [0, 0, 1, 1], [], []>} : vector<2x64xf32>, vector<64x128xf32>, vector<2x128xf32> -> vector<2x128xf32>
    %18 = arith.addf %16, %17 : vector<2x128xf32>
    %19 = vector.extract_strided_slice %18 {offsets = [0, 0], sizes = [2, 32], strides = [1, 1]} : vector<2x128xf32> to vector<2x32xf32>
    %20 = arith.negf %19 : vector<2x32xf32>
    %21 = math.exp %20 : vector<2x32xf32>
    %cst_20 = arith.constant 1.000000e+00 : f32
    %22 = vector.broadcast %cst_20 : f32 to vector<2x32xf32>
    %23 = arith.addf %22, %21 : vector<2x32xf32>
    %24 = arith.divf %22, %23 : vector<2x32xf32>
    %25 = vector.extract_strided_slice %18 {offsets = [0, 32], sizes = [2, 32], strides = [1, 1]} : vector<2x128xf32> to vector<2x32xf32>
    %26 = arith.negf %25 : vector<2x32xf32>
    %27 = math.exp %26 : vector<2x32xf32>
    %cst_21 = arith.constant 1.000000e+00 : f32
    %28 = vector.broadcast %cst_21 : f32 to vector<2x32xf32>
    %29 = arith.addf %28, %27 : vector<2x32xf32>
    %30 = arith.divf %28, %29 : vector<2x32xf32>
    %31 = vector.extract_strided_slice %18 {offsets = [0, 64], sizes = [2, 32], strides = [1, 1]} : vector<2x128xf32> to vector<2x32xf32>
    %32 = math.tanh %31 : vector<2x32xf32>
    %33 = vector.extract_strided_slice %18 {offsets = [0, 96], sizes = [2, 32], strides = [1, 1]} : vector<2x128xf32> to vector<2x32xf32>
    %34 = arith.negf %33 : vector<2x32xf32>
    %35 = math.exp %34 : vector<2x32xf32>
    %cst_22 = arith.constant 1.000000e+00 : f32
    %36 = vector.broadcast %cst_22 : f32 to vector<2x32xf32>
    %37 = arith.addf %36, %35 : vector<2x32xf32>
    %38 = arith.divf %36, %37 : vector<2x32xf32>
    %39 = arith.mulf %30, %15 : vector<2x32xf32>
    %40 = arith.mulf %24, %32 : vector<2x32xf32>
    %41 = arith.addf %39, %40 : vector<2x32xf32>
    %42 = math.tanh %41 : vector<2x32xf32>
    %43 = arith.mulf %38, %42 : vector<2x32xf32>
    %44 = vector.shape_cast %43 : vector<2x32xf32> to vector<2x1x32xf32>
    %45 = vector.broadcast %44 : vector<2x1x32xf32> to vector<2x8x32xf32>
    %46 = arith.mulf %10, %45 : vector<2x8x32xf32>
    %cst_23 = arith.constant dense<0.000000e+00> : vector<2x8xf32>
    %47 = vector.multi_reduction <add>, %46, %cst_23 [2] : vector<2x8x32xf32> to vector<2x8xf32>
    %cst_24 = arith.constant dense<0xFF800000> : vector<2xf32>
    %48 = vector.multi_reduction <maximumf>, %47, %cst_24 [1] : vector<2x8xf32> to vector<2xf32>
    %49 = vector.shape_cast %48 : vector<2xf32> to vector<2x1xf32>
    %50 = vector.broadcast %49 : vector<2x1xf32> to vector<2x8xf32>
    %51 = arith.subf %47, %50 : vector<2x8xf32>
    %52 = math.exp %51 : vector<2x8xf32>
    %cst_25 = arith.constant dense<0.000000e+00> : vector<2xf32>
    %53 = vector.multi_reduction <add>, %52, %cst_25 [1] : vector<2x8xf32> to vector<2xf32>
    %54 = vector.shape_cast %53 : vector<2xf32> to vector<2x1xf32>
    %55 = tpu.reciprocal %54 {approx = true} : vector<2x1xf32> -> vector<2x1xf32>
    %56 = vector.shape_cast %52 : vector<2x8xf32> to vector<2x8x1xf32>
    %57 = vector.broadcast %56 : vector<2x8x1xf32> to vector<2x8x64xf32>
    %58 = arith.mulf %57, %0 : vector<2x8x64xf32>
    %cst_26 = arith.constant dense<0.000000e+00> : vector<2x64xf32>
    %59 = vector.multi_reduction <add>, %58, %cst_26 [1] : vector<2x8x64xf32> to vector<2x64xf32>
    %60 = vector.broadcast %55 : vector<2x1xf32> to vector<2x64xf32>
    %61 = arith.mulf %59, %60 : vector<2x64xf32>
    %cst_27 = arith.constant dense<0.000000e+00> : vector<2x32xf32>
    %62 = tpu.matmul %43, %12, %cst_27 {dimension_numbers = #tpu.dot_dimension_numbers<[1], [0], [0], [1], [0, 0, 1, 1], [], []>} : vector<2x32xf32>, vector<32x32xf32>, vector<2x32xf32> -> vector<2x32xf32>
    %cst_28 = arith.constant dense<0.000000e+00> : vector<2x32xf32>
    %63 = tpu.matmul %61, %13, %cst_28 {dimension_numbers = #tpu.dot_dimension_numbers<[1], [0], [0], [1], [0, 0, 1, 1], [], []>} : vector<2x64xf32>, vector<64x32xf32>, vector<2x32xf32> -> vector<2x32xf32>
    %64 = arith.addf %62, %63 : vector<2x32xf32>
    %65 = math.tanh %64 : vector<2x32xf32>
    %66 = tpu.concatenate %65, %43 in 1 : vector<2x32xf32>, vector<2x32xf32> -> vector<2x64xf32>
    %67 = vector.extract_strided_slice %6 {offsets = [2, 0], sizes = [2, 128], strides = [1, 1]} : vector<12x128xf32> to vector<2x128xf32>
    %cst_29 = arith.constant dense<0.000000e+00> : vector<2x128xf32>
    %68 = tpu.matmul %66, %11, %cst_29 {dimension_numbers = #tpu.dot_dimension_numbers<[1], [0], [0], [1], [0, 0, 1, 1], [], []>} : vector<2x64xf32>, vector<64x128xf32>, vector<2x128xf32> -> vector<2x128xf32>
    %69 = arith.addf %67, %68 : vector<2x128xf32>
    %70 = vector.extract_strided_slice %69 {offsets = [0, 0], sizes = [2, 32], strides = [1, 1]} : vector<2x128xf32> to vector<2x32xf32>
    %71 = arith.negf %70 : vector<2x32xf32>
    %72 = math.exp %71 : vector<2x32xf32>
    %cst_30 = arith.constant 1.000000e+00 : f32
    %73 = vector.broadcast %cst_30 : f32 to vector<2x32xf32>
    %74 = arith.addf %73, %72 : vector<2x32xf32>
    %75 = arith.divf %73, %74 : vector<2x32xf32>
    %76 = vector.extract_strided_slice %69 {offsets = [0, 32], sizes = [2, 32], strides = [1, 1]} : vector<2x128xf32> to vector<2x32xf32>
    %77 = arith.negf %76 : vector<2x32xf32>
    %78 = math.exp %77 : vector<2x32xf32>
    %cst_31 = arith.constant 1.000000e+00 : f32
    %79 = vector.broadcast %cst_31 : f32 to vector<2x32xf32>
    %80 = arith.addf %79, %78 : vector<2x32xf32>
    %81 = arith.divf %79, %80 : vector<2x32xf32>
    %82 = vector.extract_strided_slice %69 {offsets = [0, 64], sizes = [2, 32], strides = [1, 1]} : vector<2x128xf32> to vector<2x32xf32>
    %83 = math.tanh %82 : vector<2x32xf32>
    %84 = vector.extract_strided_slice %69 {offsets = [0, 96], sizes = [2, 32], strides = [1, 1]} : vector<2x128xf32> to vector<2x32xf32>
    %85 = arith.negf %84 : vector<2x32xf32>
    %86 = math.exp %85 : vector<2x32xf32>
    %cst_32 = arith.constant 1.000000e+00 : f32
    %87 = vector.broadcast %cst_32 : f32 to vector<2x32xf32>
    %88 = arith.addf %87, %86 : vector<2x32xf32>
    %89 = arith.divf %87, %88 : vector<2x32xf32>
    %90 = arith.mulf %81, %41 : vector<2x32xf32>
    %91 = arith.mulf %75, %83 : vector<2x32xf32>
    %92 = arith.addf %90, %91 : vector<2x32xf32>
    %93 = math.tanh %92 : vector<2x32xf32>
    %94 = arith.mulf %89, %93 : vector<2x32xf32>
    %95 = vector.shape_cast %94 : vector<2x32xf32> to vector<2x1x32xf32>
    %96 = vector.broadcast %95 : vector<2x1x32xf32> to vector<2x8x32xf32>
    %97 = arith.mulf %10, %96 : vector<2x8x32xf32>
    %cst_33 = arith.constant dense<0.000000e+00> : vector<2x8xf32>
    %98 = vector.multi_reduction <add>, %97, %cst_33 [2] : vector<2x8x32xf32> to vector<2x8xf32>
    %cst_34 = arith.constant dense<0xFF800000> : vector<2xf32>
    %99 = vector.multi_reduction <maximumf>, %98, %cst_34 [1] : vector<2x8xf32> to vector<2xf32>
    %100 = vector.shape_cast %99 : vector<2xf32> to vector<2x1xf32>
    %101 = vector.broadcast %100 : vector<2x1xf32> to vector<2x8xf32>
    %102 = arith.subf %98, %101 : vector<2x8xf32>
    %103 = math.exp %102 : vector<2x8xf32>
    %cst_35 = arith.constant dense<0.000000e+00> : vector<2xf32>
    %104 = vector.multi_reduction <add>, %103, %cst_35 [1] : vector<2x8xf32> to vector<2xf32>
    %105 = vector.shape_cast %104 : vector<2xf32> to vector<2x1xf32>
    %106 = tpu.reciprocal %105 {approx = true} : vector<2x1xf32> -> vector<2x1xf32>
    %107 = vector.shape_cast %103 : vector<2x8xf32> to vector<2x8x1xf32>
    %108 = vector.broadcast %107 : vector<2x8x1xf32> to vector<2x8x64xf32>
    %109 = arith.mulf %108, %0 : vector<2x8x64xf32>
    %cst_36 = arith.constant dense<0.000000e+00> : vector<2x64xf32>
    %110 = vector.multi_reduction <add>, %109, %cst_36 [1] : vector<2x8x64xf32> to vector<2x64xf32>
    %111 = vector.broadcast %106 : vector<2x1xf32> to vector<2x64xf32>
    %112 = arith.mulf %110, %111 : vector<2x64xf32>
    %cst_37 = arith.constant dense<0.000000e+00> : vector<2x32xf32>
    %113 = tpu.matmul %94, %12, %cst_37 {dimension_numbers = #tpu.dot_dimension_numbers<[1], [0], [0], [1], [0, 0, 1, 1], [], []>} : vector<2x32xf32>, vector<32x32xf32>, vector<2x32xf32> -> vector<2x32xf32>
    %cst_38 = arith.constant dense<0.000000e+00> : vector<2x32xf32>
    %114 = tpu.matmul %112, %13, %cst_38 {dimension_numbers = #tpu.dot_dimension_numbers<[1], [0], [0], [1], [0, 0, 1, 1], [], []>} : vector<2x64xf32>, vector<64x32xf32>, vector<2x32xf32> -> vector<2x32xf32>
    %115 = arith.addf %113, %114 : vector<2x32xf32>
    %116 = math.tanh %115 : vector<2x32xf32>
    %117 = tpu.concatenate %116, %94 in 1 : vector<2x32xf32>, vector<2x32xf32> -> vector<2x64xf32>
    %118 = vector.extract_strided_slice %6 {offsets = [4, 0], sizes = [2, 128], strides = [1, 1]} : vector<12x128xf32> to vector<2x128xf32>
    %cst_39 = arith.constant dense<0.000000e+00> : vector<2x128xf32>
    %119 = tpu.matmul %117, %11, %cst_39 {dimension_numbers = #tpu.dot_dimension_numbers<[1], [0], [0], [1], [0, 0, 1, 1], [], []>} : vector<2x64xf32>, vector<64x128xf32>, vector<2x128xf32> -> vector<2x128xf32>
    %120 = arith.addf %118, %119 : vector<2x128xf32>
    %121 = vector.extract_strided_slice %120 {offsets = [0, 0], sizes = [2, 32], strides = [1, 1]} : vector<2x128xf32> to vector<2x32xf32>
    %122 = arith.negf %121 : vector<2x32xf32>
    %123 = math.exp %122 : vector<2x32xf32>
    %cst_40 = arith.constant 1.000000e+00 : f32
    %124 = vector.broadcast %cst_40 : f32 to vector<2x32xf32>
    %125 = arith.addf %124, %123 : vector<2x32xf32>
    %126 = arith.divf %124, %125 : vector<2x32xf32>
    %127 = vector.extract_strided_slice %120 {offsets = [0, 32], sizes = [2, 32], strides = [1, 1]} : vector<2x128xf32> to vector<2x32xf32>
    %128 = arith.negf %127 : vector<2x32xf32>
    %129 = math.exp %128 : vector<2x32xf32>
    %cst_41 = arith.constant 1.000000e+00 : f32
    %130 = vector.broadcast %cst_41 : f32 to vector<2x32xf32>
    %131 = arith.addf %130, %129 : vector<2x32xf32>
    %132 = arith.divf %130, %131 : vector<2x32xf32>
    %133 = vector.extract_strided_slice %120 {offsets = [0, 64], sizes = [2, 32], strides = [1, 1]} : vector<2x128xf32> to vector<2x32xf32>
    %134 = math.tanh %133 : vector<2x32xf32>
    %135 = vector.extract_strided_slice %120 {offsets = [0, 96], sizes = [2, 32], strides = [1, 1]} : vector<2x128xf32> to vector<2x32xf32>
    %136 = arith.negf %135 : vector<2x32xf32>
    %137 = math.exp %136 : vector<2x32xf32>
    %cst_42 = arith.constant 1.000000e+00 : f32
    %138 = vector.broadcast %cst_42 : f32 to vector<2x32xf32>
    %139 = arith.addf %138, %137 : vector<2x32xf32>
    %140 = arith.divf %138, %139 : vector<2x32xf32>
    %141 = arith.mulf %132, %92 : vector<2x32xf32>
    %142 = arith.mulf %126, %134 : vector<2x32xf32>
    %143 = arith.addf %141, %142 : vector<2x32xf32>
    %144 = math.tanh %143 : vector<2x32xf32>
    %145 = arith.mulf %140, %144 : vector<2x32xf32>
    %146 = vector.shape_cast %145 : vector<2x32xf32> to vector<2x1x32xf32>
    %147 = vector.broadcast %146 : vector<2x1x32xf32> to vector<2x8x32xf32>
    %148 = arith.mulf %10, %147 : vector<2x8x32xf32>
    %cst_43 = arith.constant dense<0.000000e+00> : vector<2x8xf32>
    %149 = vector.multi_reduction <add>, %148, %cst_43 [2] : vector<2x8x32xf32> to vector<2x8xf32>
    %cst_44 = arith.constant dense<0xFF800000> : vector<2xf32>
    %150 = vector.multi_reduction <maximumf>, %149, %cst_44 [1] : vector<2x8xf32> to vector<2xf32>
    %151 = vector.shape_cast %150 : vector<2xf32> to vector<2x1xf32>
    %152 = vector.broadcast %151 : vector<2x1xf32> to vector<2x8xf32>
    %153 = arith.subf %149, %152 : vector<2x8xf32>
    %154 = math.exp %153 : vector<2x8xf32>
    %cst_45 = arith.constant dense<0.000000e+00> : vector<2xf32>
    %155 = vector.multi_reduction <add>, %154, %cst_45 [1] : vector<2x8xf32> to vector<2xf32>
    %156 = vector.shape_cast %155 : vector<2xf32> to vector<2x1xf32>
    %157 = tpu.reciprocal %156 {approx = true} : vector<2x1xf32> -> vector<2x1xf32>
    %158 = vector.shape_cast %154 : vector<2x8xf32> to vector<2x8x1xf32>
    %159 = vector.broadcast %158 : vector<2x8x1xf32> to vector<2x8x64xf32>
    %160 = arith.mulf %159, %0 : vector<2x8x64xf32>
    %cst_46 = arith.constant dense<0.000000e+00> : vector<2x64xf32>
    %161 = vector.multi_reduction <add>, %160, %cst_46 [1] : vector<2x8x64xf32> to vector<2x64xf32>
    %162 = vector.broadcast %157 : vector<2x1xf32> to vector<2x64xf32>
    %163 = arith.mulf %161, %162 : vector<2x64xf32>
    %cst_47 = arith.constant dense<0.000000e+00> : vector<2x32xf32>
    %164 = tpu.matmul %145, %12, %cst_47 {dimension_numbers = #tpu.dot_dimension_numbers<[1], [0], [0], [1], [0, 0, 1, 1], [], []>} : vector<2x32xf32>, vector<32x32xf32>, vector<2x32xf32> -> vector<2x32xf32>
    %cst_48 = arith.constant dense<0.000000e+00> : vector<2x32xf32>
    %165 = tpu.matmul %163, %13, %cst_48 {dimension_numbers = #tpu.dot_dimension_numbers<[1], [0], [0], [1], [0, 0, 1, 1], [], []>} : vector<2x64xf32>, vector<64x32xf32>, vector<2x32xf32> -> vector<2x32xf32>
    %166 = arith.addf %164, %165 : vector<2x32xf32>
    %167 = math.tanh %166 : vector<2x32xf32>
    %168 = tpu.concatenate %167, %145 in 1 : vector<2x32xf32>, vector<2x32xf32> -> vector<2x64xf32>
    %169 = vector.extract_strided_slice %6 {offsets = [6, 0], sizes = [2, 128], strides = [1, 1]} : vector<12x128xf32> to vector<2x128xf32>
    %cst_49 = arith.constant dense<0.000000e+00> : vector<2x128xf32>
    %170 = tpu.matmul %168, %11, %cst_49 {dimension_numbers = #tpu.dot_dimension_numbers<[1], [0], [0], [1], [0, 0, 1, 1], [], []>} : vector<2x64xf32>, vector<64x128xf32>, vector<2x128xf32> -> vector<2x128xf32>
    %171 = arith.addf %169, %170 : vector<2x128xf32>
    %172 = vector.extract_strided_slice %171 {offsets = [0, 0], sizes = [2, 32], strides = [1, 1]} : vector<2x128xf32> to vector<2x32xf32>
    %173 = arith.negf %172 : vector<2x32xf32>
    %174 = math.exp %173 : vector<2x32xf32>
    %cst_50 = arith.constant 1.000000e+00 : f32
    %175 = vector.broadcast %cst_50 : f32 to vector<2x32xf32>
    %176 = arith.addf %175, %174 : vector<2x32xf32>
    %177 = arith.divf %175, %176 : vector<2x32xf32>
    %178 = vector.extract_strided_slice %171 {offsets = [0, 32], sizes = [2, 32], strides = [1, 1]} : vector<2x128xf32> to vector<2x32xf32>
    %179 = arith.negf %178 : vector<2x32xf32>
    %180 = math.exp %179 : vector<2x32xf32>
    %cst_51 = arith.constant 1.000000e+00 : f32
    %181 = vector.broadcast %cst_51 : f32 to vector<2x32xf32>
    %182 = arith.addf %181, %180 : vector<2x32xf32>
    %183 = arith.divf %181, %182 : vector<2x32xf32>
    %184 = vector.extract_strided_slice %171 {offsets = [0, 64], sizes = [2, 32], strides = [1, 1]} : vector<2x128xf32> to vector<2x32xf32>
    %185 = math.tanh %184 : vector<2x32xf32>
    %186 = vector.extract_strided_slice %171 {offsets = [0, 96], sizes = [2, 32], strides = [1, 1]} : vector<2x128xf32> to vector<2x32xf32>
    %187 = arith.negf %186 : vector<2x32xf32>
    %188 = math.exp %187 : vector<2x32xf32>
    %cst_52 = arith.constant 1.000000e+00 : f32
    %189 = vector.broadcast %cst_52 : f32 to vector<2x32xf32>
    %190 = arith.addf %189, %188 : vector<2x32xf32>
    %191 = arith.divf %189, %190 : vector<2x32xf32>
    %192 = arith.mulf %183, %143 : vector<2x32xf32>
    %193 = arith.mulf %177, %185 : vector<2x32xf32>
    %194 = arith.addf %192, %193 : vector<2x32xf32>
    %195 = math.tanh %194 : vector<2x32xf32>
    %196 = arith.mulf %191, %195 : vector<2x32xf32>
    %197 = vector.shape_cast %196 : vector<2x32xf32> to vector<2x1x32xf32>
    %198 = vector.broadcast %197 : vector<2x1x32xf32> to vector<2x8x32xf32>
    %199 = arith.mulf %10, %198 : vector<2x8x32xf32>
    %cst_53 = arith.constant dense<0.000000e+00> : vector<2x8xf32>
    %200 = vector.multi_reduction <add>, %199, %cst_53 [2] : vector<2x8x32xf32> to vector<2x8xf32>
    %cst_54 = arith.constant dense<0xFF800000> : vector<2xf32>
    %201 = vector.multi_reduction <maximumf>, %200, %cst_54 [1] : vector<2x8xf32> to vector<2xf32>
    %202 = vector.shape_cast %201 : vector<2xf32> to vector<2x1xf32>
    %203 = vector.broadcast %202 : vector<2x1xf32> to vector<2x8xf32>
    %204 = arith.subf %200, %203 : vector<2x8xf32>
    %205 = math.exp %204 : vector<2x8xf32>
    %cst_55 = arith.constant dense<0.000000e+00> : vector<2xf32>
    %206 = vector.multi_reduction <add>, %205, %cst_55 [1] : vector<2x8xf32> to vector<2xf32>
    %207 = vector.shape_cast %206 : vector<2xf32> to vector<2x1xf32>
    %208 = tpu.reciprocal %207 {approx = true} : vector<2x1xf32> -> vector<2x1xf32>
    %209 = vector.shape_cast %205 : vector<2x8xf32> to vector<2x8x1xf32>
    %210 = vector.broadcast %209 : vector<2x8x1xf32> to vector<2x8x64xf32>
    %211 = arith.mulf %210, %0 : vector<2x8x64xf32>
    %cst_56 = arith.constant dense<0.000000e+00> : vector<2x64xf32>
    %212 = vector.multi_reduction <add>, %211, %cst_56 [1] : vector<2x8x64xf32> to vector<2x64xf32>
    %213 = vector.broadcast %208 : vector<2x1xf32> to vector<2x64xf32>
    %214 = arith.mulf %212, %213 : vector<2x64xf32>
    %cst_57 = arith.constant dense<0.000000e+00> : vector<2x32xf32>
    %215 = tpu.matmul %196, %12, %cst_57 {dimension_numbers = #tpu.dot_dimension_numbers<[1], [0], [0], [1], [0, 0, 1, 1], [], []>} : vector<2x32xf32>, vector<32x32xf32>, vector<2x32xf32> -> vector<2x32xf32>
    %cst_58 = arith.constant dense<0.000000e+00> : vector<2x32xf32>
    %216 = tpu.matmul %214, %13, %cst_58 {dimension_numbers = #tpu.dot_dimension_numbers<[1], [0], [0], [1], [0, 0, 1, 1], [], []>} : vector<2x64xf32>, vector<64x32xf32>, vector<2x32xf32> -> vector<2x32xf32>
    %217 = arith.addf %215, %216 : vector<2x32xf32>
    %218 = math.tanh %217 : vector<2x32xf32>
    %219 = tpu.concatenate %218, %196 in 1 : vector<2x32xf32>, vector<2x32xf32> -> vector<2x64xf32>
    %220 = vector.extract_strided_slice %6 {offsets = [8, 0], sizes = [2, 128], strides = [1, 1]} : vector<12x128xf32> to vector<2x128xf32>
    %cst_59 = arith.constant dense<0.000000e+00> : vector<2x128xf32>
    %221 = tpu.matmul %219, %11, %cst_59 {dimension_numbers = #tpu.dot_dimension_numbers<[1], [0], [0], [1], [0, 0, 1, 1], [], []>} : vector<2x64xf32>, vector<64x128xf32>, vector<2x128xf32> -> vector<2x128xf32>
    %222 = arith.addf %220, %221 : vector<2x128xf32>
    %223 = vector.extract_strided_slice %222 {offsets = [0, 0], sizes = [2, 32], strides = [1, 1]} : vector<2x128xf32> to vector<2x32xf32>
    %224 = arith.negf %223 : vector<2x32xf32>
    %225 = math.exp %224 : vector<2x32xf32>
    %cst_60 = arith.constant 1.000000e+00 : f32
    %226 = vector.broadcast %cst_60 : f32 to vector<2x32xf32>
    %227 = arith.addf %226, %225 : vector<2x32xf32>
    %228 = arith.divf %226, %227 : vector<2x32xf32>
    %229 = vector.extract_strided_slice %222 {offsets = [0, 32], sizes = [2, 32], strides = [1, 1]} : vector<2x128xf32> to vector<2x32xf32>
    %230 = arith.negf %229 : vector<2x32xf32>
    %231 = math.exp %230 : vector<2x32xf32>
    %cst_61 = arith.constant 1.000000e+00 : f32
    %232 = vector.broadcast %cst_61 : f32 to vector<2x32xf32>
    %233 = arith.addf %232, %231 : vector<2x32xf32>
    %234 = arith.divf %232, %233 : vector<2x32xf32>
    %235 = vector.extract_strided_slice %222 {offsets = [0, 64], sizes = [2, 32], strides = [1, 1]} : vector<2x128xf32> to vector<2x32xf32>
    %236 = math.tanh %235 : vector<2x32xf32>
    %237 = vector.extract_strided_slice %222 {offsets = [0, 96], sizes = [2, 32], strides = [1, 1]} : vector<2x128xf32> to vector<2x32xf32>
    %238 = arith.negf %237 : vector<2x32xf32>
    %239 = math.exp %238 : vector<2x32xf32>
    %cst_62 = arith.constant 1.000000e+00 : f32
    %240 = vector.broadcast %cst_62 : f32 to vector<2x32xf32>
    %241 = arith.addf %240, %239 : vector<2x32xf32>
    %242 = arith.divf %240, %241 : vector<2x32xf32>
    %243 = arith.mulf %234, %194 : vector<2x32xf32>
    %244 = arith.mulf %228, %236 : vector<2x32xf32>
    %245 = arith.addf %243, %244 : vector<2x32xf32>
    %246 = math.tanh %245 : vector<2x32xf32>
    %247 = arith.mulf %242, %246 : vector<2x32xf32>
    %248 = vector.shape_cast %247 : vector<2x32xf32> to vector<2x1x32xf32>
    %249 = vector.broadcast %248 : vector<2x1x32xf32> to vector<2x8x32xf32>
    %250 = arith.mulf %10, %249 : vector<2x8x32xf32>
    %cst_63 = arith.constant dense<0.000000e+00> : vector<2x8xf32>
    %251 = vector.multi_reduction <add>, %250, %cst_63 [2] : vector<2x8x32xf32> to vector<2x8xf32>
    %cst_64 = arith.constant dense<0xFF800000> : vector<2xf32>
    %252 = vector.multi_reduction <maximumf>, %251, %cst_64 [1] : vector<2x8xf32> to vector<2xf32>
    %253 = vector.shape_cast %252 : vector<2xf32> to vector<2x1xf32>
    %254 = vector.broadcast %253 : vector<2x1xf32> to vector<2x8xf32>
    %255 = arith.subf %251, %254 : vector<2x8xf32>
    %256 = math.exp %255 : vector<2x8xf32>
    %cst_65 = arith.constant dense<0.000000e+00> : vector<2xf32>
    %257 = vector.multi_reduction <add>, %256, %cst_65 [1] : vector<2x8xf32> to vector<2xf32>
    %258 = vector.shape_cast %257 : vector<2xf32> to vector<2x1xf32>
    %259 = tpu.reciprocal %258 {approx = true} : vector<2x1xf32> -> vector<2x1xf32>
    %260 = vector.shape_cast %256 : vector<2x8xf32> to vector<2x8x1xf32>
    %261 = vector.broadcast %260 : vector<2x8x1xf32> to vector<2x8x64xf32>
    %262 = arith.mulf %261, %0 : vector<2x8x64xf32>
    %cst_66 = arith.constant dense<0.000000e+00> : vector<2x64xf32>
    %263 = vector.multi_reduction <add>, %262, %cst_66 [1] : vector<2x8x64xf32> to vector<2x64xf32>
    %264 = vector.broadcast %259 : vector<2x1xf32> to vector<2x64xf32>
    %265 = arith.mulf %263, %264 : vector<2x64xf32>
    %cst_67 = arith.constant dense<0.000000e+00> : vector<2x32xf32>
    %266 = tpu.matmul %247, %12, %cst_67 {dimension_numbers = #tpu.dot_dimension_numbers<[1], [0], [0], [1], [0, 0, 1, 1], [], []>} : vector<2x32xf32>, vector<32x32xf32>, vector<2x32xf32> -> vector<2x32xf32>
    %cst_68 = arith.constant dense<0.000000e+00> : vector<2x32xf32>
    %267 = tpu.matmul %265, %13, %cst_68 {dimension_numbers = #tpu.dot_dimension_numbers<[1], [0], [0], [1], [0, 0, 1, 1], [], []>} : vector<2x64xf32>, vector<64x32xf32>, vector<2x32xf32> -> vector<2x32xf32>
    %268 = arith.addf %266, %267 : vector<2x32xf32>
    %269 = math.tanh %268 : vector<2x32xf32>
    %270 = tpu.concatenate %269, %247 in 1 : vector<2x32xf32>, vector<2x32xf32> -> vector<2x64xf32>
    %271 = vector.extract_strided_slice %6 {offsets = [10, 0], sizes = [2, 128], strides = [1, 1]} : vector<12x128xf32> to vector<2x128xf32>
    %cst_69 = arith.constant dense<0.000000e+00> : vector<2x128xf32>
    %272 = tpu.matmul %270, %11, %cst_69 {dimension_numbers = #tpu.dot_dimension_numbers<[1], [0], [0], [1], [0, 0, 1, 1], [], []>} : vector<2x64xf32>, vector<64x128xf32>, vector<2x128xf32> -> vector<2x128xf32>
    %273 = arith.addf %271, %272 : vector<2x128xf32>
    %274 = vector.extract_strided_slice %273 {offsets = [0, 0], sizes = [2, 32], strides = [1, 1]} : vector<2x128xf32> to vector<2x32xf32>
    %275 = arith.negf %274 : vector<2x32xf32>
    %276 = math.exp %275 : vector<2x32xf32>
    %cst_70 = arith.constant 1.000000e+00 : f32
    %277 = vector.broadcast %cst_70 : f32 to vector<2x32xf32>
    %278 = arith.addf %277, %276 : vector<2x32xf32>
    %279 = arith.divf %277, %278 : vector<2x32xf32>
    %280 = vector.extract_strided_slice %273 {offsets = [0, 32], sizes = [2, 32], strides = [1, 1]} : vector<2x128xf32> to vector<2x32xf32>
    %281 = arith.negf %280 : vector<2x32xf32>
    %282 = math.exp %281 : vector<2x32xf32>
    %cst_71 = arith.constant 1.000000e+00 : f32
    %283 = vector.broadcast %cst_71 : f32 to vector<2x32xf32>
    %284 = arith.addf %283, %282 : vector<2x32xf32>
    %285 = arith.divf %283, %284 : vector<2x32xf32>
    %286 = vector.extract_strided_slice %273 {offsets = [0, 64], sizes = [2, 32], strides = [1, 1]} : vector<2x128xf32> to vector<2x32xf32>
    %287 = math.tanh %286 : vector<2x32xf32>
    %288 = vector.extract_strided_slice %273 {offsets = [0, 96], sizes = [2, 32], strides = [1, 1]} : vector<2x128xf32> to vector<2x32xf32>
    %289 = arith.negf %288 : vector<2x32xf32>
    %290 = math.exp %289 : vector<2x32xf32>
    %cst_72 = arith.constant 1.000000e+00 : f32
    %291 = vector.broadcast %cst_72 : f32 to vector<2x32xf32>
    %292 = arith.addf %291, %290 : vector<2x32xf32>
    %293 = arith.divf %291, %292 : vector<2x32xf32>
    %294 = arith.mulf %285, %245 : vector<2x32xf32>
    %295 = arith.mulf %279, %287 : vector<2x32xf32>
    %296 = arith.addf %294, %295 : vector<2x32xf32>
    %297 = math.tanh %296 : vector<2x32xf32>
    %298 = arith.mulf %293, %297 : vector<2x32xf32>
    %299 = vector.shape_cast %298 : vector<2x32xf32> to vector<2x1x32xf32>
    %300 = vector.broadcast %299 : vector<2x1x32xf32> to vector<2x8x32xf32>
    %301 = arith.mulf %10, %300 : vector<2x8x32xf32>
    %cst_73 = arith.constant dense<0.000000e+00> : vector<2x8xf32>
    %302 = vector.multi_reduction <add>, %301, %cst_73 [2] : vector<2x8x32xf32> to vector<2x8xf32>
    %cst_74 = arith.constant dense<0xFF800000> : vector<2xf32>
    %303 = vector.multi_reduction <maximumf>, %302, %cst_74 [1] : vector<2x8xf32> to vector<2xf32>
    %304 = vector.shape_cast %303 : vector<2xf32> to vector<2x1xf32>
    %305 = vector.broadcast %304 : vector<2x1xf32> to vector<2x8xf32>
    %306 = arith.subf %302, %305 : vector<2x8xf32>
    %307 = math.exp %306 : vector<2x8xf32>
    %cst_75 = arith.constant dense<0.000000e+00> : vector<2xf32>
    %308 = vector.multi_reduction <add>, %307, %cst_75 [1] : vector<2x8xf32> to vector<2xf32>
    %309 = vector.shape_cast %308 : vector<2xf32> to vector<2x1xf32>
    %310 = tpu.reciprocal %309 {approx = true} : vector<2x1xf32> -> vector<2x1xf32>
    %311 = vector.shape_cast %307 : vector<2x8xf32> to vector<2x8x1xf32>
    %312 = vector.broadcast %311 : vector<2x8x1xf32> to vector<2x8x64xf32>
    %313 = arith.mulf %312, %0 : vector<2x8x64xf32>
    %cst_76 = arith.constant dense<0.000000e+00> : vector<2x64xf32>
    %314 = vector.multi_reduction <add>, %313, %cst_76 [1] : vector<2x8x64xf32> to vector<2x64xf32>
    %315 = vector.broadcast %310 : vector<2x1xf32> to vector<2x64xf32>
    %316 = arith.mulf %314, %315 : vector<2x64xf32>
    %cst_77 = arith.constant dense<0.000000e+00> : vector<2x32xf32>
    %317 = tpu.matmul %298, %12, %cst_77 {dimension_numbers = #tpu.dot_dimension_numbers<[1], [0], [0], [1], [0, 0, 1, 1], [], []>} : vector<2x32xf32>, vector<32x32xf32>, vector<2x32xf32> -> vector<2x32xf32>
    %cst_78 = arith.constant dense<0.000000e+00> : vector<2x32xf32>
    %318 = tpu.matmul %316, %13, %cst_78 {dimension_numbers = #tpu.dot_dimension_numbers<[1], [0], [0], [1], [0, 0, 1, 1], [], []>} : vector<2x64xf32>, vector<64x32xf32>, vector<2x32xf32> -> vector<2x32xf32>
    %319 = arith.addf %317, %318 : vector<2x32xf32>
    %320 = math.tanh %319 : vector<2x32xf32>
    %321 = tpu.concatenate %65, %116, %167, %218, %269, %320 in 0 : vector<2x32xf32>, vector<2x32xf32>, vector<2x32xf32>, vector<2x32xf32>, vector<2x32xf32>, vector<2x32xf32> -> vector<12x32xf32>
    %c0_79 = arith.constant 0 : index
    %c0_80 = arith.constant 0 : index
    %322 = vector.load %arg8[%c0_79, %c0_80] : memref<32x128xf32, #tpu.memory_space<vmem>>, vector<32x128xf32>
    %cst_81 = arith.constant dense<0.000000e+00> : vector<12x128xf32>
    %323 = tpu.matmul %321, %322, %cst_81 {dimension_numbers = #tpu.dot_dimension_numbers<[1], [0], [0], [1], [0, 0, 1, 1], [], []>} : vector<12x32xf32>, vector<32x128xf32>, vector<12x128xf32> -> vector<12x128xf32>
    %c0_82 = arith.constant 0 : index
    %c0_83 = arith.constant 0 : index
    %324 = vector.load %arg9[%c0_82, %c0_83] : memref<1x128xf32, #tpu.memory_space<vmem>>, vector<1x128xf32>
    %325 = vector.broadcast %324 : vector<1x128xf32> to vector<12x128xf32>
    %326 = arith.addf %323, %325 : vector<12x128xf32>
    %cst_84 = arith.constant dense<0xFF800000> : vector<12xf32>
    %327 = vector.multi_reduction <maximumf>, %326, %cst_84 [1] : vector<12x128xf32> to vector<12xf32>
    %328 = vector.shape_cast %327 : vector<12xf32> to vector<12x1xf32>
    %329 = vector.broadcast %328 : vector<12x1xf32> to vector<12x128xf32>
    %330 = arith.subf %326, %329 : vector<12x128xf32>
    %331 = math.exp %330 : vector<12x128xf32>
    %cst_85 = arith.constant dense<0.000000e+00> : vector<12xf32>
    %332 = vector.multi_reduction <add>, %331, %cst_85 [1] : vector<12x128xf32> to vector<12xf32>
    %333 = vector.shape_cast %332 : vector<12xf32> to vector<12x1xf32>
    %334 = math.log %333 : vector<12x1xf32>
    %335 = arith.addf %328, %334 : vector<12x1xf32>
    %336 = vector.broadcast %335 : vector<12x1xf32> to vector<12x128xf32>
    %337 = arith.subf %326, %336 : vector<12x128xf32>
    %c0_86 = arith.constant 0 : index
    %c0_87 = arith.constant 0 : index
    %338 = vector.load %arg10[%c0_86, %c0_87] : memref<12x128xf32, #tpu.memory_space<vmem>>, vector<12x128xf32>
    tpu.vector_store %arg10[%c0_86, %c0_87], %337 {strides = array<i32>} : memref<12x128xf32, #tpu.memory_space<vmem>>, vector<12x128xf32>,
    return
  }
}

</mosaic_0001>

<llo_original>
// kernel: nmt_forward.1
$region0: #{nmt_forward.1}
  #allocation0 [shape = 'u32[]', space=smem, size = 0x4, offset = 0x4, fixed_abs, tag = 'smem constant byte address 0x4 - core index']
  #allocation1 [shape = 'u32[144,128]{1,0:T(1,128)}', space=vmem, size = 0x12000, scoped, tag = 'internal scratch']
  %s0 = inlined_call_operand.vmem [shape: f32[12,32], index: 0, kind: input, shape index: {}]
  %s1 = inlined_call_operand.vmem [shape: f32[2,8,64], index: 1, kind: input, shape index: {}]
  %s2 = inlined_call_operand.vmem [shape: f32[32,128], index: 2, kind: input, shape index: {}]
  %s3 = inlined_call_operand.vmem [shape: f32[64,128], index: 3, kind: input, shape index: {}]
  %s4 = inlined_call_operand.vmem [shape: f32[1,128], index: 4, kind: input, shape index: {}]
  %s5 = inlined_call_operand.vmem [shape: f32[64,32], index: 5, kind: input, shape index: {}]
  %s6 = inlined_call_operand.vmem [shape: f32[32,32], index: 6, kind: input, shape index: {}]
  %s7 = inlined_call_operand.vmem [shape: f32[64,32], index: 7, kind: input, shape index: {}]
  %s8 = inlined_call_operand.vmem [shape: f32[32,128], index: 8, kind: input, shape index: {}]
  %s9 = inlined_call_operand.vmem [shape: f32[1,128], index: 9, kind: input, shape index: {}]
  %s10 = inlined_call_operand.vmem [shape: f32[12,128], index: 10, kind: output, shape index: {}]
  %s11 = sld [smem:[#allocation0]]
  $region50: #{nmt_forward.1} parent=0
    _
  %s13 = ssub.s32 1, %s11
  %s14 = scalar_select 0, %s13, %s11
  // Predicated region
  $region2: #{nmt_forward.1} parent=0 // pred_check
    _
  $region3: #{nmt_forward.1} parent=0 // pred_check_branch
    %16 = sbr.rel (0) target = $region5
  $region4: #{nmt_forward.1} parent=0 // pred_region
    _
  $region5: #{nmt_forward.1} parent=0 // pred_fallthru
    _
  // Predicated region
  $region6: #{nmt_forward.1} parent=0 // pred_check
    _
  $region7: #{nmt_forward.1} parent=0 // pred_check_branch
    %18 = sbr.rel (0) target = $region9
  $region8: #{nmt_forward.1} parent=0 // pred_region
    _
  $region9: #{nmt_forward.1} parent=0 // pred_fallthru
    _
  // Predicated region
  $region10: #{nmt_forward.1} parent=0 // pred_check
    _
  $region11: #{nmt_forward.1} parent=0 // pred_check_branch
    %20 = sbr.rel (0) target = $region13
  $region12: #{nmt_forward.1} parent=0 // pred_region
    _
  $region13: #{nmt_forward.1} parent=0 // pred_fallthru
    _
  // Predicated region
  $region14: #{nmt_forward.1} parent=0 // pred_check
    _
  $region15: #{nmt_forward.1} parent=0 // pred_check_branch
    %22 = sbr.rel (0) target = $region17
  $region16: #{nmt_forward.1} parent=0 // pred_region
    _
  $region17: #{nmt_forward.1} parent=0 // pred_fallthru
    _
  // Predicated region
  $region18: #{nmt_forward.1} parent=0 // pred_check
    _
  $region19: #{nmt_forward.1} parent=0 // pred_check_branch
    %24 = sbr.rel (0) target = $region21
  $region20: #{nmt_forward.1} parent=0 // pred_region
    _
  $region21: #{nmt_forward.1} parent=0 // pred_fallthru
    _
  // Predicated region
  $region22: #{nmt_forward.1} parent=0 // pred_check
    _
  $region23: #{nmt_forward.1} parent=0 // pred_check_branch
    %26 = sbr.rel (0) target = $region25
  $region24: #{nmt_forward.1} parent=0 // pred_region
    _
  $region25: #{nmt_forward.1} parent=0 // pred_fallthru
    _
  // Predicated region
  $region26: #{nmt_forward.1} parent=0 // pred_check
    _
  $region27: #{nmt_forward.1} parent=0 // pred_check_branch
    %28 = sbr.rel (0) target = $region29
  $region28: #{nmt_forward.1} parent=0 // pred_region
    _
  $region29: #{nmt_forward.1} parent=0 // pred_fallthru
    _
  // Predicated region
  $region30: #{nmt_forward.1} parent=0 // pred_check
    _
  $region31: #{nmt_forward.1} parent=0 // pred_check_branch
    %30 = sbr.rel (0) target = $region33
  $region32: #{nmt_forward.1} parent=0 // pred_region
    _
  $region33: #{nmt_forward.1} parent=0 // pred_fallthru
    _
  // Predicated region
  $region34: #{nmt_forward.1} parent=0 // pred_check
    _
  $region35: #{nmt_forward.1} parent=0 // pred_check_branch
    %32 = sbr.rel (0) target = $region37
  $region36: #{nmt_forward.1} parent=0 // pred_region
    _
  $region37: #{nmt_forward.1} parent=0 // pred_fallthru
    _
  // Predicated region
  $region38: #{nmt_forward.1} parent=0 // pred_check
    _
  $region39: #{nmt_forward.1} parent=0 // pred_check_branch
    %34 = sbr.rel (0) target = $region41
  $region40: #{nmt_forward.1} parent=0 // pred_region
    _
  $region41: #{nmt_forward.1} parent=0 // pred_fallthru
    _
  %v35 = vld [vmem:[%s1] sm:$0xff]
  %v36 = vld [vmem:[%s1 + $0x8] sm:$0xff]
  %v37 = vld [vmem:[%s0] sm:$0xff]
  %v38 = vld [vmem:[%s0 + $0x8] sm:$0xf]
  %v39 = vld [vmem:[%s2] sm:$0xff]
  %v40 = vld [vmem:[%s2 + $0x8] sm:$0xff]
  %v41 = vld [vmem:[%s2 + $0x10] sm:$0xff]
  %v42 = vld [vmem:[%s2 + $0x18] sm:$0xff]
  %v43 = vld [vmem:[%s4] sm:$0x1]
  %v45 = vlaneseq
  %v46 = vshrl.u32 %v45, 7
  %v47 = vsub.s32 0, %v46
  %v48 = vrot.slane %v43, %v47
  %vm50 = vcmask 261120
  %v52 = vsel %vm50, %v37, 0
  %v55 = vsel %vm50, %v38, 0
  %57 = vmatprep.subr.mxu0 0.0
  %58 = vmatpush1.msra.mxu0 %v39
  %59 = vmatprep.subr.mxu0 0.0
  %60 = vmatpush1.msra.mxu0 %v40
  %61 = vmatprep.subr.mxu0 0.0
  %62 = vmatpush1.msra.mxu0 %v41
  %63 = vmatprep.subr.mxu0 0.0
  %64 = vmatpush1.msra.mxu0 %v42
  %65 = vmatprep.subr.mxu0 0.0
  %66 = vmatpush1.msra.mxu0 0.0
  %67 = vmatprep.subr.mxu0 0.0
  %68 = vmatpush1.msra.mxu0 0.0
  %69 = vmatprep.subr.mxu0 0.0
  %70 = vmatpush1.msra.mxu0 0.0
  %71 = vmatprep.subr.mxu0 0.0
  %72 = vmatpush1.msra.mxu0 0.0
  %73 = vmatprep.subr.mxu0 0.0
  %74 = vmatpush1.msra.mxu0 0.0
  %75 = vmatprep.subr.mxu0 0.0
  %76 = vmatpush1.msra.mxu0 0.0
  %77 = vmatprep.subr.mxu0 0.0
  %78 = vmatpush1.msra.mxu0 0.0
  %79 = vmatprep.subr.mxu0 0.0
  %80 = vmatpush1.msra.mxu0 0.0
  %81 = vmatprep.subr.mxu0 0.0
  %82 = vmatpush1.msra.mxu0 0.0
  %83 = vmatprep.subr.mxu0 0.0
  %84 = vmatpush1.msra.mxu0 0.0
  %85 = vmatprep.subr.mxu0 0.0
  %86 = vmatpush1.msra.mxu0 0.0
  %87 = vmatprep.subr.mxu0 0.0
  %88 = vmatpush1.msra.mxu0 0.0
  %89 = vmatprep.subr.mxu0 0.0
  %90 = vmatpush1.msra.mxu0 0.0
  %91 = vmatprep.subr.mxu0 0.0
  %92 = vmatpush1.msra.mxu0 0.0
  %93 = vmatprep.subr.mxu0 0.0
  %94 = vmatpush1.msra.mxu0 0.0
  %95 = vmatprep.subr.mxu0 0.0
  %96 = vmatpush1.msra.mxu0 0.0
  %97 = vmatprep.subr.mxu0 0.0
  %98 = vmatpush1.msra.mxu0 0.0
  %99 = vmatprep.subr.mxu0 0.0
  %100 = vmatpush1.msra.mxu0 0.0
  %101 = vmatprep.subr.mxu0 0.0
  %102 = vmatpush1.msra.mxu0 0.0
  %103 = vmatprep.subr.mxu0 0.0
  %104 = vmatpush1.msra.mxu0 0.0
  %105 = vmatprep.subr.mxu0 0.0
  %106 = vmatpush1.msra.mxu0 0.0
  %107 = vmatprep.subr.mxu0 0.0
  %108 = vmatpush1.msra.mxu0 0.0
  %109 = vmatprep.subr.mxu0 0.0
  %110 = vmatpush1.msra.mxu0 0.0
  %111 = vmatprep.subr.mxu0 0.0
  %112 = vmatpush1.msra.mxu0 0.0
  %113 = vmatprep.subr.mxu0 0.0
  %114 = vmatpush1.msra.mxu0 0.0
  %115 = vmatprep.subr.mxu0 0.0
  %116 = vmatpush1.msra.mxu0 0.0
  %117 = vmatprep.subr.mxu0 0.0
  %118 = vmatpush1.msra.mxu0 0.0
  %119 = vmatprep.subr.mxu0 0.0
  %120 = vmatpush1.msra.mxu0 0.0
  %121 = vmatprep.mubr.f32.mxu0 0.0
  %122 = vmatmul.mubr.f32.gmra.mrb[0].mxu0 %v52
  %v123 = vpop.f32.mrb[0].mxu0
  %v124 = vadd.f32 %v48, %v123
  %v125 = vpop.f32.mrb[0].mxu0
  %126 = vmatprep.mubr.f32.mxu0 0.0
  %127 = vmatmul.mubr.f32.gmra.mrb[0].mxu0 %v55
  %v128 = vpop.f32.mrb[0].mxu0
  %v129 = vadd.f32 %v48, %v128
  %v130 = vpop.f32.mrb[0].mxu0
  %131 = vdwg.mxu0
  %v132 = vld [vmem:[%s5] sm:$0xff]
  %v133 = vld [vmem:[%s5 + $0x8] sm:$0xff]
  %v134 = vld [vmem:[%s5 + $0x10] sm:$0xff]
  %v135 = vld [vmem:[%s5 + $0x18] sm:$0xff]
  %v136 = vld [vmem:[%s5 + $0x20] sm:$0xff]
  %v137 = vld [vmem:[%s5 + $0x28] sm:$0xff]
  %v138 = vld [vmem:[%s5 + $0x30] sm:$0xff]
  %v139 = vld [vmem:[%s5 + $0x38] sm:$0xff]
  %vm140 = vcmask 523264
  %v142 = vsel %vm140, %v35, 0
  %v145 = vsel %vm140, %v36, 0
  %147 = vmatprep.subr.mxu0 0.0
  %148 = vmatpush1.msra.mxu0 %v132
  %149 = vmatprep.subr.mxu0 0.0
  %150 = vmatpush1.msra.mxu0 %v133
  %151 = vmatprep.subr.mxu0 0.0
  %152 = vmatpush1.msra.mxu0 %v134
  %153 = vmatprep.subr.mxu0 0.0
  %154 = vmatpush1.msra.mxu0 %v135
  %155 = vmatprep.subr.mxu0 0.0
  %156 = vmatpush1.msra.mxu0 %v136
  %157 = vmatprep.subr.mxu0 0.0
  %158 = vmatpush1.msra.mxu0 %v137
  %159 = vmatprep.subr.mxu0 0.0
  %160 = vmatpush1.msra.mxu0 %v138
  %161 = vmatprep.subr.mxu0 0.0
  %162 = vmatpush1.msra.mxu0 %v139
  %163 = vmatprep.subr.mxu0 0.0
  %164 = vmatpush1.msra.mxu0 0.0
  %165 = vmatprep.subr.mxu0 0.0
  %166 = vmatpush1.msra.mxu0 0.0
  %167 = vmatprep.subr.mxu0 0.0
  %168 = vmatpush1.msra.mxu0 0.0
  %169 = vmatprep.subr.mxu0 0.0
  %170 = vmatpush1.msra.mxu0 0.0
  %171 = vmatprep.subr.mxu0 0.0
  %172 = vmatpush1.msra.mxu0 0.0
  %173 = vmatprep.subr.mxu0 0.0
  %174 = vmatpush1.msra.mxu0 0.0
  %175 = vmatprep.subr.mxu0 0.0
  %176 = vmatpush1.msra.mxu0 0.0
  %177 = vmatprep.subr.mxu0 0.0
  %178 = vmatpush1.msra.mxu0 0.0
  %179 = vmatprep.subr.mxu0 0.0
  %180 = vmatpush1.msra.mxu0 0.0
  %181 = vmatprep.subr.mxu0 0.0
  %182 = vmatpush1.msra.mxu0 0.0
  %183 = vmatprep.subr.mxu0 0.0
  %184 = vmatpush1.msra.mxu0 0.0
  %185 = vmatprep.subr.mxu0 0.0
  %186 = vmatpush1.msra.mxu0 0.0
  %187 = vmatprep.subr.mxu0 0.0
  %188 = vmatpush1.msra.mxu0 0.0
  %189 = vmatprep.subr.mxu0 0.0
  %190 = vmatpush1.msra.mxu0 0.0
  %191 = vmatprep.subr.mxu0 0.0
  %192 = vmatpush1.msra.mxu0 0.0
  %193 = vmatprep.subr.mxu0 0.0
  %194 = vmatpush1.msra.mxu0 0.0
  %195 = vmatprep.subr.mxu0 0.0
  %196 = vmatpush1.msra.mxu0 0.0
  %197 = vmatprep.subr.mxu0 0.0
  %198 = vmatpush1.msra.mxu0 0.0
  %199 = vmatprep.subr.mxu0 0.0
  %200 = vmatpush1.msra.mxu0 0.0
  %201 = vmatprep.subr.mxu0 0.0
  %202 = vmatpush1.msra.mxu0 0.0
  %203 = vmatprep.subr.mxu0 0.0
  %204 = vmatpush1.msra.mxu0 0.0
  %205 = vmatprep.subr.mxu0 0.0
  %206 = vmatpush1.msra.mxu0 0.0
  %207 = vmatprep.subr.mxu0 0.0
  %208 = vmatpush1.msra.mxu0 0.0
  %209 = vmatprep.subr.mxu0 0.0
  %210 = vmatpush1.msra.mxu0 0.0
  %211 = vmatprep.mubr.f32.mxu0 0.0
  %212 = vmatmul.mubr.f32.gmra.mrb[0].mxu0 %v142
  %v213 = vpop.f32.mrb[0].mxu0
  %v214 = vadd.f32 0.0, %v213
  %v215 = vpop.f32.mrb[0].mxu0
  %216 = vmatprep.mubr.f32.mxu0 0.0
  %217 = vmatmul.mubr.f32.gmra.mrb[0].mxu0 %v145
  %v218 = vpop.f32.mrb[0].mxu0
  %v219 = vadd.f32 0.0, %v218
  %v220 = vpop.f32.mrb[0].mxu0
  %221 = vdwg.mxu0
  %v222 = vld [vmem:[%s3] sm:$0xff]
  %v223 = vld [vmem:[%s3 + $0x8] sm:$0xff]
  %v224 = vld [vmem:[%s3 + $0x10] sm:$0xff]
  %v225 = vld [vmem:[%s3 + $0x18] sm:$0xff]
  %v226 = vld [vmem:[%s3 + $0x20] sm:$0xff]
  %v227 = vld [vmem:[%s3 + $0x28] sm:$0xff]
  %v228 = vld [vmem:[%s3 + $0x30] sm:$0xff]
  %v229 = vld [vmem:[%s3 + $0x38] sm:$0xff]
  %v230 = vld [vmem:[%s6] sm:$0xff]
  %v231 = vld [vmem:[%s6 + $0x8] sm:$0xff]
  %v232 = vld [vmem:[%s6 + $0x10] sm:$0xff]
  %v233 = vld [vmem:[%s6 + $0x18] sm:$0xff]
  %v234 = vld [vmem:[%s7] sm:$0xff]
  %v235 = vld [vmem:[%s7 + $0x8] sm:$0xff]
  %v236 = vld [vmem:[%s7 + $0x10] sm:$0xff]
  %v237 = vld [vmem:[%s7 + $0x18] sm:$0xff]
  %v238 = vld [vmem:[%s7 + $0x20] sm:$0xff]
  %v239 = vld [vmem:[%s7 + $0x28] sm:$0xff]
  %v240 = vld [vmem:[%s7 + $0x30] sm:$0xff]
  %v241 = vld [vmem:[%s7 + $0x38] sm:$0xff]
  %v243 = vsel %vm140, 0.0, 0
  %245 = vmatprep.subr.mxu0 0.0
  %246 = vmatpush1.msra.mxu0 %v222
  %247 = vmatprep.subr.mxu0 0.0
  %248 = vmatpush1.msra.mxu0 %v223
  %249 = vmatprep.subr.mxu0 0.0
  %250 = vmatpush1.msra.mxu0 %v224
  %251 = vmatprep.subr.mxu0 0.0
  %252 = vmatpush1.msra.mxu0 %v225
  %253 = vmatprep.subr.mxu0 0.0
  %254 = vmatpush1.msra.mxu0 %v226
  %255 = vmatprep.subr.mxu0 0.0
  %256 = vmatpush1.msra.mxu0 %v227
  %257 = vmatprep.subr.mxu0 0.0
  %258 = vmatpush1.msra.mxu0 %v228
  %259 = vmatprep.subr.mxu0 0.0
  %260 = vmatpush1.msra.mxu0 %v229
  %261 = vmatprep.subr.mxu0 0.0
  %262 = vmatpush1.msra.mxu0 0.0
  %263 = vmatprep.subr.mxu0 0.0
  %264 = vmatpush1.msra.mxu0 0.0
  %265 = vmatprep.subr.mxu0 0.0
  %266 = vmatpush1.msra.mxu0 0.0
  %267 = vmatprep.subr.mxu0 0.0
  %268 = vmatpush1.msra.mxu0 0.0
  %269 = vmatprep.subr.mxu0 0.0
  %270 = vmatpush1.msra.mxu0 0.0
  %271 = vmatprep.subr.mxu0 0.0
  %272 = vmatpush1.msra.mxu0 0.0
  %273 = vmatprep.subr.mxu0 0.0
  %274 = vmatpush1.msra.mxu0 0.0
  %275 = vmatprep.subr.mxu0 0.0
  %276 = vmatpush1.msra.mxu0 0.0
  %277 = vmatprep.subr.mxu0 0.0
  %278 = vmatpush1.msra.mxu0 0.0
  %279 = vmatprep.subr.mxu0 0.0
  %280 = vmatpush1.msra.mxu0 0.0
  %281 = vmatprep.subr.mxu0 0.0
  %282 = vmatpush1.msra.mxu0 0.0
  %283 = vmatprep.subr.mxu0 0.0
  %284 = vmatpush1.msra.mxu0 0.0
  %285 = vmatprep.subr.mxu0 0.0
  %286 = vmatpush1.msra.mxu0 0.0
  %287 = vmatprep.subr.mxu0 0.0
  %288 = vmatpush1.msra.mxu0 0.0
  %289 = vmatprep.subr.mxu0 0.0
  %290 = vmatpush1.msra.mxu0 0.0
  %291 = vmatprep.subr.mxu0 0.0
  %292 = vmatpush1.msra.mxu0 0.0
  %293 = vmatprep.subr.mxu0 0.0
  %294 = vmatpush1.msra.mxu0 0.0
  %295 = vmatprep.subr.mxu0 0.0
  %296 = vmatpush1.msra.mxu0 0.0
  %297 = vmatprep.subr.mxu0 0.0
  %298 = vmatpush1.msra.mxu0 0.0
  %299 = vmatprep.subr.mxu0 0.0
  %300 = vmatpush1.msra.mxu0 0.0
  %301 = vmatprep.subr.mxu0 0.0
  %302 = vmatpush1.msra.mxu0 0.0
  %303 = vmatprep.subr.mxu0 0.0
  %304 = vmatpush1.msra.mxu0 0.0
  %305 = vmatprep.subr.mxu0 0.0
  %306 = vmatpush1.msra.mxu0 0.0
  %307 = vmatprep.subr.mxu0 0.0
  %308 = vmatpush1.msra.mxu0 0.0
  %309 = vmatprep.mubr.f32.mxu0 0.0
  %310 = vmatmul.mubr.f32.gmra.mrb[0].mxu0 %v243
  %v311 = vpop.f32.mrb[0].mxu0
  %v312 = vadd.f32 0.0, %v311
  %v313 = vpop.f32.mrb[0].mxu0
  %314 = vdwg.mxu0
  %v315 = vadd.f32 %v124, %v312
  %v316 = vxor.u32 %v315, 2147483648
  %v317 = vmul.f32 %v316, 1.442695
  %v318 = vpow.pop %v317
  %v319 = vadd.f32 %v318, 1.0
  %v320 = vrcp.pop %v319
  %v321 = vmul.f32 1.0, %v320
  %v322 = vtanh.pop %v315
  %v323 = vmul.f32 %v321, 0.0
  %325 = vrot.lane.b32.xlu0 %v322, 64
  %v326 = vpop.permute.xlu0 %325
  %v328 = vmul.f32 %v321, %v326
  %330 = vrot.lane.b32.xlu0 %v328, 32
  %v331 = vpop.permute.xlu0 %330
  %v333 = vadd.f32 %v323, %v331
  %v334 = vtanh.pop %v333
  %336 = vrot.lane.b32.xlu0 %v334, 64
  %v337 = vpop.permute.xlu0 %336
  %v339 = vmul.f32 %v321, %v337
  %v342 = vunpack.c.l.s4 1966171168
  %v343 = vunpack.c.0.s8 %v342
  %v344 = vlaneseq
  %v345 = vshrl.u32 %v344, 7
  %v346 = vsub.s32 %v343, %v345
  %v347 = vrot.slane %v339, %v346
  %v348 = vcombine.high %v347, %v347
  %v350 = vunpack.c.l.s4 1966171168
  %v351 = vunpack.c.0.s8 %v350
  %v352 = vlaneseq
  %v353 = vshrl.u32 %v352, 7
  %v354 = vsub.s32 %v351, %v353
  %v355 = vrot.slane %v347, %v354
  %v357 = vunpack.c.l.s4 1966171168
  %v358 = vunpack.c.0.s8 %v357
  %v359 = vlaneseq
  %v360 = vshrl.u32 %v359, 7
  %v361 = vsub.s32 %v358, %v360
  %v362 = vrot.slane %v348, %v361
  %v363 = vlaneseq
  %v364 = vshrl.u32 %v363, 7
  %v365 = vsub.s32 0, %v364
  %v366 = vrot.slane %v355, %v365
  %v367 = vlaneseq
  %v368 = vshrl.u32 %v367, 7
  %v369 = vsub.s32 0, %v368
  %v370 = vrot.slane %v362, %v369
  %371 = vrot.lane.b32.xlu0 %v366, 32
  %v372 = vpop.permute.xlu0 %371
  %373 = vrot.lane.b32.xlu0 %v370, 32
  %v374 = vpop.permute.xlu0 %373
  %v377 = vmul.f32 %v214, %v372
  %v378 = vmul.f32 %v219, %v374
  %v379 = vsel %vm50, %v377, 0.0
  %380 = vadd.xlane.f32.xlu0 %v379
  %v381 = vpop.xlane.xlu0 %380
  %v382 = vsel %vm50, %v378, 0.0
  %383 = vadd.xlane.f32.xlu0 %v382
  %v384 = vpop.xlane.xlu0 %383
  %v387 = vlaneseq
  %v388 = vand.u32 %v387, 127
  %v389 = vlaneseq
  %v390 = vshrl.u32 %v389, 7
  %v391 = vsub.s32 %v388, %v390
  %v392 = vrot.slane %v381, %v391
  %v393 = vlaneseq
  %v394 = vshrl.u32 %v393, 7
  %v395 = vsub.s32 %v388, %v394
  %v396 = vrot.slane %v384, %v395
  %vm397 = vcmask 1041409
  %v398 = vsel %vm397, %v396, %v392
  %vm400 = vcmask 58368
  %v401 = vsel %vm400, %v398, -inf
  %402 = vmax.xlane.f32.xlu0 %v401
  %v403 = vpop.xlane.xlu0 %402
  %v405 = vlaneseq
  %v406 = vshrl.u32 %v405, 7
  %v407 = vsub.s32 0, %v406
  %v408 = vrot.slane %v403, %v407
  %v409 = vlaneseq
  %v410 = vshrl.u32 %v409, 7
  %v411 = vsub.s32 1, %v410
  %v412 = vrot.slane %v403, %v411
  %v415 = vsub.f32 %v381, %v408
  %v416 = vsub.f32 %v384, %v412
  %v417 = vmul.f32 %v415, 1.442695
  %v418 = vpow.pop %v417
  %v419 = vmul.f32 %v416, 1.442695
  %v420 = vpow.pop %v419
  %423 = vset.pattern.permute.xlu0 0
  %424 = vperm.xlu0 %423, %v418
  %v425 = vpop.permute.xlu0 %424
  %426 = vset.pattern.permute.xlu0 0
  %427 = vperm.xlu0 %426, %v420
  %v428 = vpop.permute.xlu0 %427
  %v429 = vlaneseq
  %v430 = vshrl.u32 %v429, 7
  %v431 = vsub.s32 %v388, %v430
  %v432 = vrot.slane %v425, %v431
  %v433 = vlaneseq
  %v434 = vshrl.u32 %v433, 7
  %v435 = vsub.s32 %v388, %v434
  %v436 = vrot.slane %v428, %v435
  %v437 = vsel %vm397, %v436, %v432
  %v439 = vsel %vm400, %v437, 0.0
  %440 = vadd.xlane.f32.xlu0 %v439
  %v441 = vpop.xlane.xlu0 %440
  %v442 = vrcp.pop %v441
  %v445 = vmul.f32 %v425, %v35
  %v446 = vmul.f32 %v428, %v36
  %v447 = vsel %vm140, %v445, 0.0
  %v448 = vrot.slane %v447, 4
  %v449 = vadd.f32 %v447, %v448
  %v450 = vrot.slane %v449, 2
  %v451 = vadd.f32 %v449, %v450
  %v452 = vrot.slane %v451, 1
  %v453 = vadd.f32 %v451, %v452
  %v454 = vsel %vm140, %v446, 0.0
  %v455 = vrot.slane %v454, 4
  %v456 = vadd.f32 %v454, %v455
  %v457 = vrot.slane %v456, 2
  %v458 = vadd.f32 %v456, %v457
  %v459 = vrot.slane %v458, 1
  %v460 = vadd.f32 %v458, %v459
  %v462 = vrot.slane %v442, 1
  %v465 = vmul.f32 %v453, %v442
  %v466 = vmul.f32 %v460, %v462
  %v469 = vrot.slane %v466, 7
  %v470 = vsel %vm397, %v469, %v465
  %v471 = vsel %vm140, %v470, 0
  %473 = vmatprep.subr.mxu0 0.0
  %474 = vmatpush1.msra.mxu0 %v234
  %475 = vmatprep.subr.mxu0 0.0
  %476 = vmatpush1.msra.mxu0 %v235
  %477 = vmatprep.subr.mxu0 0.0
  %478 = vmatpush1.msra.mxu0 %v236
  %479 = vmatprep.subr.mxu0 0.0
  %480 = vmatpush1.msra.mxu0 %v237
  %481 = vmatprep.subr.mxu0 0.0
  %482 = vmatpush1.msra.mxu0 %v238
  %483 = vmatprep.subr.mxu0 0.0
  %484 = vmatpush1.msra.mxu0 %v239
  %485 = vmatprep.subr.mxu0 0.0
  %486 = vmatpush1.msra.mxu0 %v240
  %487 = vmatprep.subr.mxu0 0.0
  %488 = vmatpush1.msra.mxu0 %v241
  %489 = vmatprep.subr.mxu0 0.0
  %490 = vmatpush1.msra.mxu0 0.0
  %491 = vmatprep.subr.mxu0 0.0
  %492 = vmatpush1.msra.mxu0 0.0
  %493 = vmatprep.subr.mxu0 0.0
  %494 = vmatpush1.msra.mxu0 0.0
  %495 = vmatprep.subr.mxu0 0.0
  %496 = vmatpush1.msra.mxu0 0.0
  %497 = vmatprep.subr.mxu0 0.0
  %498 = vmatpush1.msra.mxu0 0.0
  %499 = vmatprep.subr.mxu0 0.0
  %500 = vmatpush1.msra.mxu0 0.0
  %501 = vmatprep.subr.mxu0 0.0
  %502 = vmatpush1.msra.mxu0 0.0
  %503 = vmatprep.subr.mxu0 0.0
  %504 = vmatpush1.msra.mxu0 0.0
  %505 = vmatprep.subr.mxu0 0.0
  %506 = vmatpush1.msra.mxu0 0.0
  %507 = vmatprep.subr.mxu0 0.0
  %508 = vmatpush1.msra.mxu0 0.0
  %509 = vmatprep.subr.mxu0 0.0
  %510 = vmatpush1.msra.mxu0 0.0
  %511 = vmatprep.subr.mxu0 0.0
  %512 = vmatpush1.msra.mxu0 0.0
  %513 = vmatprep.subr.mxu0 0.0
  %514 = vmatpush1.msra.mxu0 0.0
  %515 = vmatprep.subr.mxu0 0.0
  %516 = vmatpush1.msra.mxu0 0.0
  %517 = vmatprep.subr.mxu0 0.0
  %518 = vmatpush1.msra.mxu0 0.0
  %519 = vmatprep.subr.mxu0 0.0
  %520 = vmatpush1.msra.mxu0 0.0
  %521 = vmatprep.subr.mxu0 0.0
  %522 = vmatpush1.msra.mxu0 0.0
  %523 = vmatprep.subr.mxu0 0.0
  %524 = vmatpush1.msra.mxu0 0.0
  %525 = vmatprep.subr.mxu0 0.0
  %526 = vmatpush1.msra.mxu0 0.0
  %527 = vmatprep.subr.mxu0 0.0
  %528 = vmatpush1.msra.mxu0 0.0
  %529 = vmatprep.subr.mxu0 0.0
  %530 = vmatpush1.msra.mxu0 0.0
  %531 = vmatprep.subr.mxu0 0.0
  %532 = vmatpush1.msra.mxu0 0.0
  %533 = vmatprep.subr.mxu0 0.0
  %534 = vmatpush1.msra.mxu0 0.0
  %535 = vmatprep.subr.mxu0 0.0
  %536 = vmatpush1.msra.mxu0 0.0
  %537 = vmatprep.mubr.f32.mxu0 0.0
  %538 = vmatmul.mubr.f32.gmra.mrb[0].mxu0 %v471
  %v539 = vpop.f32.mrb[0].mxu0
  %v540 = vadd.f32 0.0, %v539
  %v541 = vpop.f32.mrb[0].mxu0
  %542 = vdwg.mxu0
  %543 = vrot.lane.b32.xlu0 %v339, 32
  %v544 = vpop.permute.xlu0 %543
  %v545 = vsel %vm50, %v544, 0
  %547 = vmatprep.subr.mxu0 0.0
  %548 = vmatpush1.msra.mxu0 %v230
  %549 = vmatprep.subr.mxu0 0.0
  %550 = vmatpush1.msra.mxu0 %v231
  %551 = vmatprep.subr.mxu0 0.0
  %552 = vmatpush1.msra.mxu0 %v232
  %553 = vmatprep.subr.mxu0 0.0
  %554 = vmatpush1.msra.mxu0 %v233
  %555 = vmatprep.subr.mxu0 0.0
  %556 = vmatpush1.msra.mxu0 0.0
  %557 = vmatprep.subr.mxu0 0.0
  %558 = vmatpush1.msra.mxu0 0.0
  %559 = vmatprep.subr.mxu0 0.0
  %560 = vmatpush1.msra.mxu0 0.0
  %561 = vmatprep.subr.mxu0 0.0
  %562 = vmatpush1.msra.mxu0 0.0
  %563 = vmatprep.subr.mxu0 0.0
  %564 = vmatpush1.msra.mxu0 0.0
  %565 = vmatprep.subr.mxu0 0.0
  %566 = vmatpush1.msra.mxu0 0.0
  %567 = vmatprep.subr.mxu0 0.0
  %568 = vmatpush1.msra.mxu0 0.0
  %569 = vmatprep.subr.mxu0 0.0
  %570 = vmatpush1.msra.mxu0 0.0
  %571 = vmatprep.subr.mxu0 0.0
  %572 = vmatpush1.msra.mxu0 0.0
  %573 = vmatprep.subr.mxu0 0.0
  %574 = vmatpush1.msra.mxu0 0.0
  %575 = vmatprep.subr.mxu0 0.0
  %576 = vmatpush1.msra.mxu0 0.0
  %577 = vmatprep.subr.mxu0 0.0
  %578 = vmatpush1.msra.mxu0 0.0
  %579 = vmatprep.subr.mxu0 0.0
  %580 = vmatpush1.msra.mxu0 0.0
  %581 = vmatprep.subr.mxu0 0.0
  %582 = vmatpush1.msra.mxu0 0.0
  %583 = vmatprep.subr.mxu0 0.0
  %584 = vmatpush1.msra.mxu0 0.0
  %585 = vmatprep.subr.mxu0 0.0
  %586 = vmatpush1.msra.mxu0 0.0
  %587 = vmatprep.subr.mxu0 0.0
  %588 = vmatpush1.msra.mxu0 0.0
  %589 = vmatprep.subr.mxu0 0.0
  %590 = vmatpush1.msra.mxu0 0.0
  %591 = vmatprep.subr.mxu0 0.0
  %592 = vmatpush1.msra.mxu0 0.0
  %593 = vmatprep.subr.mxu0 0.0
  %594 = vmatpush1.msra.mxu0 0.0
  %595 = vmatprep.subr.mxu0 0.0
  %596 = vmatpush1.msra.mxu0 0.0
  %597 = vmatprep.subr.mxu0 0.0
  %598 = vmatpush1.msra.mxu0 0.0
  %599 = vmatprep.subr.mxu0 0.0
  %600 = vmatpush1.msra.mxu0 0.0
  %601 = vmatprep.subr.mxu0 0.0
  %602 = vmatpush1.msra.mxu0 0.0
  %603 = vmatprep.subr.mxu0 0.0
  %604 = vmatpush1.msra.mxu0 0.0
  %605 = vmatprep.subr.mxu0 0.0
  %606 = vmatpush1.msra.mxu0 0.0
  %607 = vmatprep.subr.mxu0 0.0
  %608 = vmatpush1.msra.mxu0 0.0
  %609 = vmatprep.subr.mxu0 0.0
  %610 = vmatpush1.msra.mxu0 0.0
  %611 = vmatprep.mubr.f32.mxu0 0.0
  %612 = vmatmul.mubr.f32.gmra.mrb[0].mxu0 %v545
  %v613 = vpop.f32.mrb[0].mxu0
  %v614 = vadd.f32 %v540, %v613
  %v615 = vpop.f32.mrb[0].mxu0
  %616 = vdwg.mxu0
  %v617 = vtanh.pop %v614
  %618 = vrot.lane.b32.xlu0 %v339, 64
  %v619 = vpop.permute.xlu0 %618
  %v621 = vsel %vm50, %v617, %v619
  %v623 = vsel %vm140, %v621, 0
  %625 = vmatprep.subr.mxu0 0.0
  %626 = vmatpush1.msra.mxu0 %v222
  %627 = vmatprep.subr.mxu0 0.0
  %628 = vmatpush1.msra.mxu0 %v223
  %629 = vmatprep.subr.mxu0 0.0
  %630 = vmatpush1.msra.mxu0 %v224
  %631 = vmatprep.subr.mxu0 0.0
  %632 = vmatpush1.msra.mxu0 %v225
  %633 = vmatprep.subr.mxu0 0.0
  %634 = vmatpush1.msra.mxu0 %v226
  %635 = vmatprep.subr.mxu0 0.0
  %636 = vmatpush1.msra.mxu0 %v227
  %637 = vmatprep.subr.mxu0 0.0
  %638 = vmatpush1.msra.mxu0 %v228
  %639 = vmatprep.subr.mxu0 0.0
  %640 = vmatpush1.msra.mxu0 %v229
  %641 = vmatprep.subr.mxu0 0.0
  %642 = vmatpush1.msra.mxu0 0.0
  %643 = vmatprep.subr.mxu0 0.0
  %644 = vmatpush1.msra.mxu0 0.0
  %645 = vmatprep.subr.mxu0 0.0
  %646 = vmatpush1.msra.mxu0 0.0
  %647 = vmatprep.subr.mxu0 0.0
  %648 = vmatpush1.msra.mxu0 0.0
  %649 = vmatprep.subr.mxu0 0.0
  %650 = vmatpush1.msra.mxu0 0.0
  %651 = vmatprep.subr.mxu0 0.0
  %652 = vmatpush1.msra.mxu0 0.0
  %653 = vmatprep.subr.mxu0 0.0
  %654 = vmatpush1.msra.mxu0 0.0
  %655 = vmatprep.subr.mxu0 0.0
  %656 = vmatpush1.msra.mxu0 0.0
  %657 = vmatprep.subr.mxu0 0.0
  %658 = vmatpush1.msra.mxu0 0.0
  %659 = vmatprep.subr.mxu0 0.0
  %660 = vmatpush1.msra.mxu0 0.0
  %661 = vmatprep.subr.mxu0 0.0
  %662 = vmatpush1.msra.mxu0 0.0
  %663 = vmatprep.subr.mxu0 0.0
  %664 = vmatpush1.msra.mxu0 0.0
  %665 = vmatprep.subr.mxu0 0.0
  %666 = vmatpush1.msra.mxu0 0.0
  %667 = vmatprep.subr.mxu0 0.0
  %668 = vmatpush1.msra.mxu0 0.0
  %669 = vmatprep.subr.mxu0 0.0
  %670 = vmatpush1.msra.mxu0 0.0
  %671 = vmatprep.subr.mxu0 0.0
  %672 = vmatpush1.msra.mxu0 0.0
  %673 = vmatprep.subr.mxu0 0.0
  %674 = vmatpush1.msra.mxu0 0.0
  %675 = vmatprep.subr.mxu0 0.0
  %676 = vmatpush1.msra.mxu0 0.0
  %677 = vmatprep.subr.mxu0 0.0
  %678 = vmatpush1.msra.mxu0 0.0
  %679 = vmatprep.subr.mxu0 0.0
  %680 = vmatpush1.msra.mxu0 0.0
  %681 = vmatprep.subr.mxu0 0.0
  %682 = vmatpush1.msra.mxu0 0.0
  %683 = vmatprep.subr.mxu0 0.0
  %684 = vmatpush1.msra.mxu0 0.0
  %685 = vmatprep.subr.mxu0 0.0
  %686 = vmatpush1.msra.mxu0 0.0
  %687 = vmatprep.subr.mxu0 0.0
  %688 = vmatpush1.msra.mxu0 0.0
  %689 = vmatprep.mubr.f32.mxu0 0.0
  %690 = vmatmul.mubr.f32.gmra.mrb[0].mxu0 %v623
  %v691 = vpop.f32.mrb[0].mxu0
  %v692 = vadd.f32 0.0, %v691
  %v693 = vpop.f32.mrb[0].mxu0
  %694 = vdwg.mxu0
  %v696 = vrot.slane %v692, 6
  %v698 = vadd.f32 %v124, %v696
  %v699 = vxor.u32 %v698, 2147483648
  %v700 = vmul.f32 %v699, 1.442695
  %v701 = vpow.pop %v700
  %v702 = vadd.f32 %v701, 1.0
  %v703 = vrcp.pop %v702
  %v704 = vmul.f32 1.0, %v703
  %v705 = vtanh.pop %v698
  %v707 = vrot.slane %v333, 6
  %v709 = vmul.f32 %v704, %v707
  %711 = vrot.lane.b32.xlu0 %v705, 64
  %v712 = vpop.permute.xlu0 %711
  %v714 = vmul.f32 %v704, %v712
  %716 = vrot.lane.b32.xlu0 %v714, 32
  %v717 = vpop.permute.xlu0 %716
  %v719 = vadd.f32 %v709, %v717
  %v720 = vtanh.pop %v719
  %722 = vrot.lane.b32.xlu0 %v720, 64
  %v723 = vpop.permute.xlu0 %722
  %v725 = vmul.f32 %v704, %v723
  %v728 = vunpack.c.l.s4 1966171168
  %v729 = vunpack.c.0.s8 %v728
  %v730 = vlaneseq
  %v731 = vshrl.u32 %v730, 7
  %v732 = vsub.s32 %v729, %v731
  %v733 = vrot.slane %v725, %v732
  %v734 = vcombine.high %v733, %v733
  %v736 = vunpack.c.l.s4 1966171168
  %v737 = vunpack.c.0.s8 %v736
  %v738 = vlaneseq
  %v739 = vshrl.u32 %v738, 7
  %v740 = vsub.s32 %v737, %v739
  %v741 = vrot.slane %v733, %v740
  %v743 = vunpack.c.l.s4 1966171168
  %v744 = vunpack.c.0.s8 %v743
  %v745 = vlaneseq
  %v746 = vshrl.u32 %v745, 7
  %v747 = vsub.s32 %v744, %v746
  %v748 = vrot.slane %v734, %v747
  %v749 = vcombine.high %v741, %v741
  %v750 = vcombine.high %v748, %v748
  %v751 = vlaneseq
  %v752 = vshrl.u32 %v751, 7
  %v753 = vsub.s32 0, %v752
  %v754 = vrot.slane %v749, %v753
  %v755 = vlaneseq
  %v756 = vshrl.u32 %v755, 7
  %v757 = vsub.s32 0, %v756
  %v758 = vrot.slane %v750, %v757
  %759 = vrot.lane.b32.xlu0 %v754, 32
  %v760 = vpop.permute.xlu0 %759
  %761 = vrot.lane.b32.xlu0 %v758, 32
  %v762 = vpop.permute.xlu0 %761
  %v765 = vmul.f32 %v214, %v760
  %v766 = vmul.f32 %v219, %v762
  %v767 = vsel %vm50, %v765, 0.0
  %768 = vadd.xlane.f32.xlu0 %v767
  %v769 = vpop.xlane.xlu0 %768
  %v770 = vsel %vm50, %v766, 0.0
  %771 = vadd.xlane.f32.xlu0 %v770
  %v772 = vpop.xlane.xlu0 %771
  %v775 = vlaneseq
  %v776 = vshrl.u32 %v775, 7
  %v777 = vsub.s32 %v388, %v776
  %v778 = vrot.slane %v769, %v777
  %v779 = vlaneseq
  %v780 = vshrl.u32 %v779, 7
  %v781 = vsub.s32 %v388, %v780
  %v782 = vrot.slane %v772, %v781
  %v783 = vsel %vm397, %v782, %v778
  %v785 = vsel %vm400, %v783, -inf
  %786 = vmax.xlane.f32.xlu0 %v785
  %v787 = vpop.xlane.xlu0 %786
  %v789 = vlaneseq
  %v790 = vshrl.u32 %v789, 7
  %v791 = vsub.s32 0, %v790
  %v792 = vrot.slane %v787, %v791
  %v793 = vlaneseq
  %v794 = vshrl.u32 %v793, 7
  %v795 = vsub.s32 1, %v794
  %v796 = vrot.slane %v787, %v795
  %v799 = vsub.f32 %v769, %v792
  %v800 = vsub.f32 %v772, %v796
  %v801 = vmul.f32 %v799, 1.442695
  %v802 = vpow.pop %v801
  %v803 = vmul.f32 %v800, 1.442695
  %v804 = vpow.pop %v803
  %807 = vset.pattern.permute.xlu0 0
  %808 = vperm.xlu0 %807, %v802
  %v809 = vpop.permute.xlu0 %808
  %810 = vset.pattern.permute.xlu0 0
  %811 = vperm.xlu0 %810, %v804
  %v812 = vpop.permute.xlu0 %811
  %v813 = vlaneseq
  %v814 = vshrl.u32 %v813, 7
  %v815 = vsub.s32 %v388, %v814
  %v816 = vrot.slane %v809, %v815
  %v817 = vlaneseq
  %v818 = vshrl.u32 %v817, 7
  %v819 = vsub.s32 %v388, %v818
  %v820 = vrot.slane %v812, %v819
  %v821 = vsel %vm397, %v820, %v816
  %v823 = vsel %vm400, %v821, 0.0
  %824 = vadd.xlane.f32.xlu0 %v823
  %v825 = vpop.xlane.xlu0 %824
  %v826 = vrcp.pop %v825
  %v829 = vmul.f32 %v809, %v35
  %v830 = vmul.f32 %v812, %v36
  %v831 = vsel %vm140, %v829, 0.0
  %v832 = vrot.slane %v831, 4
  %v833 = vadd.f32 %v831, %v832
  %v834 = vrot.slane %v833, 2
  %v835 = vadd.f32 %v833, %v834
  %v836 = vrot.slane %v835, 1
  %v837 = vadd.f32 %v835, %v836
  %v838 = vsel %vm140, %v830, 0.0
  %v839 = vrot.slane %v838, 4
  %v840 = vadd.f32 %v838, %v839
  %v841 = vrot.slane %v840, 2
  %v842 = vadd.f32 %v840, %v841
  %v843 = vrot.slane %v842, 1
  %v844 = vadd.f32 %v842, %v843
  %v846 = vrot.slane %v826, 1
  %v849 = vmul.f32 %v837, %v826
  %v850 = vmul.f32 %v844, %v846
  %v853 = vrot.slane %v850, 7
  %v854 = vsel %vm397, %v853, %v849
  %v855 = vsel %vm140, %v854, 0
  %857 = vmatprep.subr.mxu0 0.0
  %858 = vmatpush1.msra.mxu0 %v234
  %859 = vmatprep.subr.mxu0 0.0
  %860 = vmatpush1.msra.mxu0 %v235
  %861 = vmatprep.subr.mxu0 0.0
  %862 = vmatpush1.msra.mxu0 %v236
  %863 = vmatprep.subr.mxu0 0.0
  %864 = vmatpush1.msra.mxu0 %v237
  %865 = vmatprep.subr.mxu0 0.0
  %866 = vmatpush1.msra.mxu0 %v238
  %867 = vmatprep.subr.mxu0 0.0
  %868 = vmatpush1.msra.mxu0 %v239
  %869 = vmatprep.subr.mxu0 0.0
  %870 = vmatpush1.msra.mxu0 %v240
  %871 = vmatprep.subr.mxu0 0.0
  %872 = vmatpush1.msra.mxu0 %v241
  %873 = vmatprep.subr.mxu0 0.0
  %874 = vmatpush1.msra.mxu0 0.0
  %875 = vmatprep.subr.mxu0 0.0
  %876 = vmatpush1.msra.mxu0 0.0
  %877 = vmatprep.subr.mxu0 0.0
  %878 = vmatpush1.msra.mxu0 0.0
  %879 = vmatprep.subr.mxu0 0.0
  %880 = vmatpush1.msra.mxu0 0.0
  %881 = vmatprep.subr.mxu0 0.0
  %882 = vmatpush1.msra.mxu0 0.0
  %883 = vmatprep.subr.mxu0 0.0
  %884 = vmatpush1.msra.mxu0 0.0
  %885 = vmatprep.subr.mxu0 0.0
  %886 = vmatpush1.msra.mxu0 0.0
  %887 = vmatprep.subr.mxu0 0.0
  %888 = vmatpush1.msra.mxu0 0.0
  %889 = vmatprep.subr.mxu0 0.0
  %890 = vmatpush1.msra.mxu0 0.0
  %891 = vmatprep.subr.mxu0 0.0
  %892 = vmatpush1.msra.mxu0 0.0
  %893 = vmatprep.subr.mxu0 0.0
  %894 = vmatpush1.msra.mxu0 0.0
  %895 = vmatprep.subr.mxu0 0.0
  %896 = vmatpush1.msra.mxu0 0.0
  %897 = vmatprep.subr.mxu0 0.0
  %898 = vmatpush1.msra.mxu0 0.0
  %899 = vmatprep.subr.mxu0 0.0
  %900 = vmatpush1.msra.mxu0 0.0
  %901 = vmatprep.subr.mxu0 0.0
  %902 = vmatpush1.msra.mxu0 0.0
  %903 = vmatprep.subr.mxu0 0.0
  %904 = vmatpush1.msra.mxu0 0.0
  %905 = vmatprep.subr.mxu0 0.0
  %906 = vmatpush1.msra.mxu0 0.0
  %907 = vmatprep.subr.mxu0 0.0
  %908 = vmatpush1.msra.mxu0 0.0
  %909 = vmatprep.subr.mxu0 0.0
  %910 = vmatpush1.msra.mxu0 0.0
  %911 = vmatprep.subr.mxu0 0.0
  %912 = vmatpush1.msra.mxu0 0.0
  %913 = vmatprep.subr.mxu0 0.0
  %914 = vmatpush1.msra.mxu0 0.0
  %915 = vmatprep.subr.mxu0 0.0
  %916 = vmatpush1.msra.mxu0 0.0
  %917 = vmatprep.subr.mxu0 0.0
  %918 = vmatpush1.msra.mxu0 0.0
  %919 = vmatprep.subr.mxu0 0.0
  %920 = vmatpush1.msra.mxu0 0.0
  %921 = vmatprep.mubr.f32.mxu0 0.0
  %922 = vmatmul.mubr.f32.gmra.mrb[0].mxu0 %v855
  %v923 = vpop.f32.mrb[0].mxu0
  %v924 = vadd.f32 0.0, %v923
  %v925 = vpop.f32.mrb[0].mxu0
  %926 = vdwg.mxu0
  %v927 = vrot.slane %v725, 2
  %928 = vrot.lane.b32.xlu0 %v927, 32
  %v929 = vpop.permute.xlu0 %928
  %v930 = vsel %vm50, %v929, 0
  %932 = vmatprep.subr.mxu0 0.0
  %933 = vmatpush1.msra.mxu0 %v230
  %934 = vmatprep.subr.mxu0 0.0
  %935 = vmatpush1.msra.mxu0 %v231
  %936 = vmatprep.subr.mxu0 0.0
  %937 = vmatpush1.msra.mxu0 %v232
  %938 = vmatprep.subr.mxu0 0.0
  %939 = vmatpush1.msra.mxu0 %v233
  %940 = vmatprep.subr.mxu0 0.0
  %941 = vmatpush1.msra.mxu0 0.0
  %942 = vmatprep.subr.mxu0 0.0
  %943 = vmatpush1.msra.mxu0 0.0
  %944 = vmatprep.subr.mxu0 0.0
  %945 = vmatpush1.msra.mxu0 0.0
  %946 = vmatprep.subr.mxu0 0.0
  %947 = vmatpush1.msra.mxu0 0.0
  %948 = vmatprep.subr.mxu0 0.0
  %949 = vmatpush1.msra.mxu0 0.0
  %950 = vmatprep.subr.mxu0 0.0
  %951 = vmatpush1.msra.mxu0 0.0
  %952 = vmatprep.subr.mxu0 0.0
  %953 = vmatpush1.msra.mxu0 0.0
  %954 = vmatprep.subr.mxu0 0.0
  %955 = vmatpush1.msra.mxu0 0.0
  %956 = vmatprep.subr.mxu0 0.0
  %957 = vmatpush1.msra.mxu0 0.0
  %958 = vmatprep.subr.mxu0 0.0
  %959 = vmatpush1.msra.mxu0 0.0
  %960 = vmatprep.subr.mxu0 0.0
  %961 = vmatpush1.msra.mxu0 0.0
  %962 = vmatprep.subr.mxu0 0.0
  %963 = vmatpush1.msra.mxu0 0.0
  %964 = vmatprep.subr.mxu0 0.0
  %965 = vmatpush1.msra.mxu0 0.0
  %966 = vmatprep.subr.mxu0 0.0
  %967 = vmatpush1.msra.mxu0 0.0
  %968 = vmatprep.subr.mxu0 0.0
  %969 = vmatpush1.msra.mxu0 0.0
  %970 = vmatprep.subr.mxu0 0.0
  %971 = vmatpush1.msra.mxu0 0.0
  %972 = vmatprep.subr.mxu0 0.0
  %973 = vmatpush1.msra.mxu0 0.0
  %974 = vmatprep.subr.mxu0 0.0
  %975 = vmatpush1.msra.mxu0 0.0
  %976 = vmatprep.subr.mxu0 0.0
  %977 = vmatpush1.msra.mxu0 0.0
  %978 = vmatprep.subr.mxu0 0.0
  %979 = vmatpush1.msra.mxu0 0.0
  %980 = vmatprep.subr.mxu0 0.0
  %981 = vmatpush1.msra.mxu0 0.0
  %982 = vmatprep.subr.mxu0 0.0
  %983 = vmatpush1.msra.mxu0 0.0
  %984 = vmatprep.subr.mxu0 0.0
  %985 = vmatpush1.msra.mxu0 0.0
  %986 = vmatprep.subr.mxu0 0.0
  %987 = vmatpush1.msra.mxu0 0.0
  %988 = vmatprep.subr.mxu0 0.0
  %989 = vmatpush1.msra.mxu0 0.0
  %990 = vmatprep.subr.mxu0 0.0
  %991 = vmatpush1.msra.mxu0 0.0
  %992 = vmatprep.subr.mxu0 0.0
  %993 = vmatpush1.msra.mxu0 0.0
  %994 = vmatprep.subr.mxu0 0.0
  %995 = vmatpush1.msra.mxu0 0.0
  %996 = vmatprep.mubr.f32.mxu0 0.0
  %997 = vmatmul.mubr.f32.gmra.mrb[0].mxu0 %v930
  %v998 = vpop.f32.mrb[0].mxu0
  %v999 = vadd.f32 %v924, %v998
  %v1000 = vpop.f32.mrb[0].mxu0
  %1001 = vdwg.mxu0
  %v1002 = vtanh.pop %v999
  %1003 = vrot.lane.b32.xlu0 %v927, 64
  %v1004 = vpop.permute.xlu0 %1003
  %v1006 = vsel %vm50, %v1002, %v1004
  %v1008 = vsel %vm140, %v1006, 0
  %1010 = vmatprep.subr.mxu0 0.0
  %1011 = vmatpush1.msra.mxu0 %v222
  %1012 = vmatprep.subr.mxu0 0.0
  %1013 = vmatpush1.msra.mxu0 %v223
  %1014 = vmatprep.subr.mxu0 0.0
  %1015 = vmatpush1.msra.mxu0 %v224
  %1016 = vmatprep.subr.mxu0 0.0
  %1017 = vmatpush1.msra.mxu0 %v225
  %1018 = vmatprep.subr.mxu0 0.0
  %1019 = vmatpush1.msra.mxu0 %v226
  %1020 = vmatprep.subr.mxu0 0.0
  %1021 = vmatpush1.msra.mxu0 %v227
  %1022 = vmatprep.subr.mxu0 0.0
  %1023 = vmatpush1.msra.mxu0 %v228
  %1024 = vmatprep.subr.mxu0 0.0
  %1025 = vmatpush1.msra.mxu0 %v229
  %1026 = vmatprep.subr.mxu0 0.0
  %1027 = vmatpush1.msra.mxu0 0.0
  %1028 = vmatprep.subr.mxu0 0.0
  %1029 = vmatpush1.msra.mxu0 0.0
  %1030 = vmatprep.subr.mxu0 0.0
  %1031 = vmatpush1.msra.mxu0 0.0
  %1032 = vmatprep.subr.mxu0 0.0
  %1033 = vmatpush1.msra.mxu0 0.0
  %1034 = vmatprep.subr.mxu0 0.0
  %1035 = vmatpush1.msra.mxu0 0.0
  %1036 = vmatprep.subr.mxu0 0.0
  %1037 = vmatpush1.msra.mxu0 0.0
  %1038 = vmatprep.subr.mxu0 0.0
  %1039 = vmatpush1.msra.mxu0 0.0
  %1040 = vmatprep.subr.mxu0 0.0
  %1041 = vmatpush1.msra.mxu0 0.0
  %1042 = vmatprep.subr.mxu0 0.0
  %1043 = vmatpush1.msra.mxu0 0.0
  %1044 = vmatprep.subr.mxu0 0.0
  %1045 = vmatpush1.msra.mxu0 0.0
  %1046 = vmatprep.subr.mxu0 0.0
  %1047 = vmatpush1.msra.mxu0 0.0
  %1048 = vmatprep.subr.mxu0 0.0
  %1049 = vmatpush1.msra.mxu0 0.0
  %1050 = vmatprep.subr.mxu0 0.0
  %1051 = vmatpush1.msra.mxu0 0.0
  %1052 = vmatprep.subr.mxu0 0.0
  %1053 = vmatpush1.msra.mxu0 0.0
  %1054 = vmatprep.subr.mxu0 0.0
  %1055 = vmatpush1.msra.mxu0 0.0
  %1056 = vmatprep.subr.mxu0 0.0
  %1057 = vmatpush1.msra.mxu0 0.0
  %1058 = vmatprep.subr.mxu0 0.0
  %1059 = vmatpush1.msra.mxu0 0.0
  %1060 = vmatprep.subr.mxu0 0.0
  %1061 = vmatpush1.msra.mxu0 0.0
  %1062 = vmatprep.subr.mxu0 0.0
  %1063 = vmatpush1.msra.mxu0 0.0
  %1064 = vmatprep.subr.mxu0 0.0
  %1065 = vmatpush1.msra.mxu0 0.0
  %1066 = vmatprep.subr.mxu0 0.0
  %1067 = vmatpush1.msra.mxu0 0.0
  %1068 = vmatprep.subr.mxu0 0.0
  %1069 = vmatpush1.msra.mxu0 0.0
  %1070 = vmatprep.subr.mxu0 0.0
  %1071 = vmatpush1.msra.mxu0 0.0
  %1072 = vmatprep.subr.mxu0 0.0
  %1073 = vmatpush1.msra.mxu0 0.0
  %1074 = vmatprep.mubr.f32.mxu0 0.0
  %1075 = vmatmul.mubr.f32.gmra.mrb[0].mxu0 %v1008
  %v1076 = vpop.f32.mrb[0].mxu0
  %v1077 = vadd.f32 0.0, %v1076
  %v1078 = vpop.f32.mrb[0].mxu0
  %1079 = vdwg.mxu0
  %v1081 = vrot.slane %v1077, 4
  %v1083 = vadd.f32 %v124, %v1081
  %v1084 = vxor.u32 %v1083, 2147483648
  %v1085 = vmul.f32 %v1084, 1.442695
  %v1086 = vpow.pop %v1085
  %v1087 = vadd.f32 %v1086, 1.0
  %v1088 = vrcp.pop %v1087
  %v1089 = vmul.f32 1.0, %v1088
  %v1090 = vtanh.pop %v1083
  %v1092 = vrot.slane %v719, 6
  %v1094 = vmul.f32 %v1089, %v1092
  %1096 = vrot.lane.b32.xlu0 %v1090, 64
  %v1097 = vpop.permute.xlu0 %1096
  %v1099 = vmul.f32 %v1089, %v1097
  %1101 = vrot.lane.b32.xlu0 %v1099, 32
  %v1102 = vpop.permute.xlu0 %1101
  %v1104 = vadd.f32 %v1094, %v1102
  %v1105 = vtanh.pop %v1104
  %1107 = vrot.lane.b32.xlu0 %v1105, 64
  %v1108 = vpop.permute.xlu0 %1107
  %v1110 = vmul.f32 %v1089, %v1108
  %v1112 = vcombine.high %v1110, %v1110
  %v1114 = vunpack.c.l.s4 1966171168
  %v1115 = vunpack.c.0.s8 %v1114
  %v1116 = vlaneseq
  %v1117 = vshrl.u32 %v1116, 7
  %v1118 = vsub.s32 %v1115, %v1117
  %v1119 = vrot.slane %v1112, %v1118
  %v1120 = vcombine.high %v1119, %v1119
  %v1122 = vunpack.c.l.s4 1966171168
  %v1123 = vunpack.c.0.s8 %v1122
  %v1124 = vlaneseq
  %v1125 = vshrl.u32 %v1124, 7
  %v1126 = vsub.s32 %v1123, %v1125
  %v1127 = vrot.slane %v1119, %v1126
  %v1129 = vunpack.c.l.s4 1966171168
  %v1130 = vunpack.c.0.s8 %v1129
  %v1131 = vlaneseq
  %v1132 = vshrl.u32 %v1131, 7
  %v1133 = vsub.s32 %v1130, %v1132
  %v1134 = vrot.slane %v1120, %v1133
  %v1135 = vlaneseq
  %v1136 = vshrl.u32 %v1135, 7
  %v1137 = vsub.s32 0, %v1136
  %v1138 = vrot.slane %v1127, %v1137
  %v1139 = vlaneseq
  %v1140 = vshrl.u32 %v1139, 7
  %v1141 = vsub.s32 0, %v1140
  %v1142 = vrot.slane %v1134, %v1141
  %1143 = vrot.lane.b32.xlu0 %v1138, 32
  %v1144 = vpop.permute.xlu0 %1143
  %1145 = vrot.lane.b32.xlu0 %v1142, 32
  %v1146 = vpop.permute.xlu0 %1145
  %v1149 = vmul.f32 %v214, %v1144
  %v1150 = vmul.f32 %v219, %v1146
  %v1151 = vsel %vm50, %v1149, 0.0
  %1152 = vadd.xlane.f32.xlu0 %v1151
  %v1153 = vpop.xlane.xlu0 %1152
  %v1154 = vsel %vm50, %v1150, 0.0
  %1155 = vadd.xlane.f32.xlu0 %v1154
  %v1156 = vpop.xlane.xlu0 %1155
  %v1159 = vlaneseq
  %v1160 = vshrl.u32 %v1159, 7
  %v1161 = vsub.s32 %v388, %v1160
  %v1162 = vrot.slane %v1153, %v1161
  %v1163 = vlaneseq
  %v1164 = vshrl.u32 %v1163, 7
  %v1165 = vsub.s32 %v388, %v1164
  %v1166 = vrot.slane %v1156, %v1165
  %v1167 = vsel %vm397, %v1166, %v1162
  %v1169 = vsel %vm400, %v1167, -inf
  %1170 = vmax.xlane.f32.xlu0 %v1169
  %v1171 = vpop.xlane.xlu0 %1170
  %v1173 = vlaneseq
  %v1174 = vshrl.u32 %v1173, 7
  %v1175 = vsub.s32 0, %v1174
  %v1176 = vrot.slane %v1171, %v1175
  %v1177 = vlaneseq
  %v1178 = vshrl.u32 %v1177, 7
  %v1179 = vsub.s32 1, %v1178
  %v1180 = vrot.slane %v1171, %v1179
  %v1183 = vsub.f32 %v1153, %v1176
  %v1184 = vsub.f32 %v1156, %v1180
  %v1185 = vmul.f32 %v1183, 1.442695
  %v1186 = vpow.pop %v1185
  %v1187 = vmul.f32 %v1184, 1.442695
  %v1188 = vpow.pop %v1187
  %1191 = vset.pattern.permute.xlu0 0
  %1192 = vperm.xlu0 %1191, %v1186
  %v1193 = vpop.permute.xlu0 %1192
  %1194 = vset.pattern.permute.xlu0 0
  %1195 = vperm.xlu0 %1194, %v1188
  %v1196 = vpop.permute.xlu0 %1195
  %v1197 = vlaneseq
  %v1198 = vshrl.u32 %v1197, 7
  %v1199 = vsub.s32 %v388, %v1198
  %v1200 = vrot.slane %v1193, %v1199
  %v1201 = vlaneseq
  %v1202 = vshrl.u32 %v1201, 7
  %v1203 = vsub.s32 %v388, %v1202
  %v1204 = vrot.slane %v1196, %v1203
  %v1205 = vsel %vm397, %v1204, %v1200
  %v1207 = vsel %vm400, %v1205, 0.0
  %1208 = vadd.xlane.f32.xlu0 %v1207
  %v1209 = vpop.xlane.xlu0 %1208
  %v1210 = vrcp.pop %v1209
  %v1213 = vmul.f32 %v1193, %v35
  %v1214 = vmul.f32 %v1196, %v36
  %v1215 = vsel %vm140, %v1213, 0.0
  %v1216 = vrot.slane %v1215, 4
  %v1217 = vadd.f32 %v1215, %v1216
  %v1218 = vrot.slane %v1217, 2
  %v1219 = vadd.f32 %v1217, %v1218
  %v1220 = vrot.slane %v1219, 1
  %v1221 = vadd.f32 %v1219, %v1220
  %v1222 = vsel %vm140, %v1214, 0.0
  %v1223 = vrot.slane %v1222, 4
  %v1224 = vadd.f32 %v1222, %v1223
  %v1225 = vrot.slane %v1224, 2
  %v1226 = vadd.f32 %v1224, %v1225
  %v1227 = vrot.slane %v1226, 1
  %v1228 = vadd.f32 %v1226, %v1227
  %v1230 = vrot.slane %v1210, 1
  %v1233 = vmul.f32 %v1221, %v1210
  %v1234 = vmul.f32 %v1228, %v1230
  %v1237 = vrot.slane %v1234, 7
  %v1238 = vsel %vm397, %v1237, %v1233
  %v1239 = vsel %vm140, %v1238, 0
  %1241 = vmatprep.subr.mxu0 0.0
  %1242 = vmatpush1.msra.mxu0 %v234
  %1243 = vmatprep.subr.mxu0 0.0
  %1244 = vmatpush1.msra.mxu0 %v235
  %1245 = vmatprep.subr.mxu0 0.0
  %1246 = vmatpush1.msra.mxu0 %v236
  %1247 = vmatprep.subr.mxu0 0.0
  %1248 = vmatpush1.msra.mxu0 %v237
  %1249 = vmatprep.subr.mxu0 0.0
  %1250 = vmatpush1.msra.mxu0 %v238
  %1251 = vmatprep.subr.mxu0 0.0
  %1252 = vmatpush1.msra.mxu0 %v239
  %1253 = vmatprep.subr.mxu0 0.0
  %1254 = vmatpush1.msra.mxu0 %v240
  %1255 = vmatprep.subr.mxu0 0.0
  %1256 = vmatpush1.msra.mxu0 %v241
  %1257 = vmatprep.subr.mxu0 0.0
  %1258 = vmatpush1.msra.mxu0 0.0
  %1259 = vmatprep.subr.mxu0 0.0
  %1260 = vmatpush1.msra.mxu0 0.0
  %1261 = vmatprep.subr.mxu0 0.0
  %1262 = vmatpush1.msra.mxu0 0.0
  %1263 = vmatprep.subr.mxu0 0.0
  %1264 = vmatpush1.msra.mxu0 0.0
  %1265 = vmatprep.subr.mxu0 0.0
  %1266 = vmatpush1.msra.mxu0 0.0
  %1267 = vmatprep.subr.mxu0 0.0
  %1268 = vmatpush1.msra.mxu0 0.0
  %1269 = vmatprep.subr.mxu0 0.0
  %1270 = vmatpush1.msra.mxu0 0.0
  %1271 = vmatprep.subr.mxu0 0.0
  %1272 = vmatpush1.msra.mxu0 0.0
  %1273 = vmatprep.subr.mxu0 0.0
  %1274 = vmatpush1.msra.mxu0 0.0
  %1275 = vmatprep.subr.mxu0 0.0
  %1276 = vmatpush1.msra.mxu0 0.0
  %1277 = vmatprep.subr.mxu0 0.0
  %1278 = vmatpush1.msra.mxu0 0.0
  %1279 = vmatprep.subr.mxu0 0.0
  %1280 = vmatpush1.msra.mxu0 0.0
  %1281 = vmatprep.subr.mxu0 0.0
  %1282 = vmatpush1.msra.mxu0 0.0
  %1283 = vmatprep.subr.mxu0 0.0
  %1284 = vmatpush1.msra.mxu0 0.0
  %1285 = vmatprep.subr.mxu0 0.0
  %1286 = vmatpush1.msra.mxu0 0.0
  %1287 = vmatprep.subr.mxu0 0.0
  %1288 = vmatpush1.msra.mxu0 0.0
  %1289 = vmatprep.subr.mxu0 0.0
  %1290 = vmatpush1.msra.mxu0 0.0
  %1291 = vmatprep.subr.mxu0 0.0
  %1292 = vmatpush1.msra.mxu0 0.0
  %1293 = vmatprep.subr.mxu0 0.0
  %1294 = vmatpush1.msra.mxu0 0.0
  %1295 = vmatprep.subr.mxu0 0.0
  %1296 = vmatpush1.msra.mxu0 0.0
  %1297 = vmatprep.subr.mxu0 0.0
  %1298 = vmatpush1.msra.mxu0 0.0
  %1299 = vmatprep.subr.mxu0 0.0
  %1300 = vmatpush1.msra.mxu0 0.0
  %1301 = vmatprep.subr.mxu0 0.0
  %1302 = vmatpush1.msra.mxu0 0.0
  %1303 = vmatprep.subr.mxu0 0.0
  %1304 = vmatpush1.msra.mxu0 0.0
  %1305 = vmatprep.mubr.f32.mxu0 0.0
  %1306 = vmatmul.mubr.f32.gmra.mrb[0].mxu0 %v1239
  %v1307 = vpop.f32.mrb[0].mxu0
  %v1308 = vadd.f32 0.0, %v1307
  %v1309 = vpop.f32.mrb[0].mxu0
  %1310 = vdwg.mxu0
  %v1311 = vrot.slane %v1110, 4
  %1312 = vrot.lane.b32.xlu0 %v1311, 32
  %v1313 = vpop.permute.xlu0 %1312
  %v1314 = vsel %vm50, %v1313, 0
  %1316 = vmatprep.subr.mxu0 0.0
  %1317 = vmatpush1.msra.mxu0 %v230
  %1318 = vmatprep.subr.mxu0 0.0
  %1319 = vmatpush1.msra.mxu0 %v231
  %1320 = vmatprep.subr.mxu0 0.0
  %1321 = vmatpush1.msra.mxu0 %v232
  %1322 = vmatprep.subr.mxu0 0.0
  %1323 = vmatpush1.msra.mxu0 %v233
  %1324 = vmatprep.subr.mxu0 0.0
  %1325 = vmatpush1.msra.mxu0 0.0
  %1326 = vmatprep.subr.mxu0 0.0
  %1327 = vmatpush1.msra.mxu0 0.0
  %1328 = vmatprep.subr.mxu0 0.0
  %1329 = vmatpush1.msra.mxu0 0.0
  %1330 = vmatprep.subr.mxu0 0.0
  %1331 = vmatpush1.msra.mxu0 0.0
  %1332 = vmatprep.subr.mxu0 0.0
  %1333 = vmatpush1.msra.mxu0 0.0
  %1334 = vmatprep.subr.mxu0 0.0
  %1335 = vmatpush1.msra.mxu0 0.0
  %1336 = vmatprep.subr.mxu0 0.0
  %1337 = vmatpush1.msra.mxu0 0.0
  %1338 = vmatprep.subr.mxu0 0.0
  %1339 = vmatpush1.msra.mxu0 0.0
  %1340 = vmatprep.subr.mxu0 0.0
  %1341 = vmatpush1.msra.mxu0 0.0
  %1342 = vmatprep.subr.mxu0 0.0
  %1343 = vmatpush1.msra.mxu0 0.0
  %1344 = vmatprep.subr.mxu0 0.0
  %1345 = vmatpush1.msra.mxu0 0.0
  %1346 = vmatprep.subr.mxu0 0.0
  %1347 = vmatpush1.msra.mxu0 0.0
  %1348 = vmatprep.subr.mxu0 0.0
  %1349 = vmatpush1.msra.mxu0 0.0
  %1350 = vmatprep.subr.mxu0 0.0
  %1351 = vmatpush1.msra.mxu0 0.0
  %1352 = vmatprep.subr.mxu0 0.0
  %1353 = vmatpush1.msra.mxu0 0.0
  %1354 = vmatprep.subr.mxu0 0.0
  %1355 = vmatpush1.msra.mxu0 0.0
  %1356 = vmatprep.subr.mxu0 0.0
  %1357 = vmatpush1.msra.mxu0 0.0
  %1358 = vmatprep.subr.mxu0 0.0
  %1359 = vmatpush1.msra.mxu0 0.0
  %1360 = vmatprep.subr.mxu0 0.0
  %1361 = vmatpush1.msra.mxu0 0.0
  %1362 = vmatprep.subr.mxu0 0.0
  %1363 = vmatpush1.msra.mxu0 0.0
  %1364 = vmatprep.subr.mxu0 0.0
  %1365 = vmatpush1.msra.mxu0 0.0
  %1366 = vmatprep.subr.mxu0 0.0
  %1367 = vmatpush1.msra.mxu0 0.0
  %1368 = vmatprep.subr.mxu0 0.0
  %1369 = vmatpush1.msra.mxu0 0.0
  %1370 = vmatprep.subr.mxu0 0.0
  %1371 = vmatpush1.msra.mxu0 0.0
  %1372 = vmatprep.subr.mxu0 0.0
  %1373 = vmatpush1.msra.mxu0 0.0
  %1374 = vmatprep.subr.mxu0 0.0
  %1375 = vmatpush1.msra.mxu0 0.0
  %1376 = vmatprep.subr.mxu0 0.0
  %1377 = vmatpush1.msra.mxu0 0.0
  %1378 = vmatprep.subr.mxu0 0.0
  %1379 = vmatpush1.msra.mxu0 0.0
  %1380 = vmatprep.mubr.f32.mxu0 0.0
  %1381 = vmatmul.mubr.f32.gmra.mrb[0].mxu0 %v1314
  %v1382 = vpop.f32.mrb[0].mxu0
  %v1383 = vadd.f32 %v1308, %v1382
  %v1384 = vpop.f32.mrb[0].mxu0
  %1385 = vdwg.mxu0
  %v1386 = vtanh.pop %v1383
  %1387 = vrot.lane.b32.xlu0 %v1311, 64
  %v1388 = vpop.permute.xlu0 %1387
  %v1390 = vsel %vm50, %v1386, %v1388
  %v1392 = vsel %vm140, %v1390, 0
  %1394 = vmatprep.subr.mxu0 0.0
  %1395 = vmatpush1.msra.mxu0 %v222
  %1396 = vmatprep.subr.mxu0 0.0
  %1397 = vmatpush1.msra.mxu0 %v223
  %1398 = vmatprep.subr.mxu0 0.0
  %1399 = vmatpush1.msra.mxu0 %v224
  %1400 = vmatprep.subr.mxu0 0.0
  %1401 = vmatpush1.msra.mxu0 %v225
  %1402 = vmatprep.subr.mxu0 0.0
  %1403 = vmatpush1.msra.mxu0 %v226
  %1404 = vmatprep.subr.mxu0 0.0
  %1405 = vmatpush1.msra.mxu0 %v227
  %1406 = vmatprep.subr.mxu0 0.0
  %1407 = vmatpush1.msra.mxu0 %v228
  %1408 = vmatprep.subr.mxu0 0.0
  %1409 = vmatpush1.msra.mxu0 %v229
  %1410 = vmatprep.subr.mxu0 0.0
  %1411 = vmatpush1.msra.mxu0 0.0
  %1412 = vmatprep.subr.mxu0 0.0
  %1413 = vmatpush1.msra.mxu0 0.0
  %1414 = vmatprep.subr.mxu0 0.0
  %1415 = vmatpush1.msra.mxu0 0.0
  %1416 = vmatprep.subr.mxu0 0.0
  %1417 = vmatpush1.msra.mxu0 0.0
  %1418 = vmatprep.subr.mxu0 0.0
  %1419 = vmatpush1.msra.mxu0 0.0
  %1420 = vmatprep.subr.mxu0 0.0
  %1421 = vmatpush1.msra.mxu0 0.0
  %1422 = vmatprep.subr.mxu0 0.0
  %1423 = vmatpush1.msra.mxu0 0.0
  %1424 = vmatprep.subr.mxu0 0.0
  %1425 = vmatpush1.msra.mxu0 0.0
  %1426 = vmatprep.subr.mxu0 0.0
  %1427 = vmatpush1.msra.mxu0 0.0
  %1428 = vmatprep.subr.mxu0 0.0
  %1429 = vmatpush1.msra.mxu0 0.0
  %1430 = vmatprep.subr.mxu0 0.0
  %1431 = vmatpush1.msra.mxu0 0.0
  %1432 = vmatprep.subr.mxu0 0.0
  %1433 = vmatpush1.msra.mxu0 0.0
  %1434 = vmatprep.subr.mxu0 0.0
  %1435 = vmatpush1.msra.mxu0 0.0
  %1436 = vmatprep.subr.mxu0 0.0
  %1437 = vmatpush1.msra.mxu0 0.0
  %1438 = vmatprep.subr.mxu0 0.0
  %1439 = vmatpush1.msra.mxu0 0.0
  %1440 = vmatprep.subr.mxu0 0.0
  %1441 = vmatpush1.msra.mxu0 0.0
  %1442 = vmatprep.subr.mxu0 0.0
  %1443 = vmatpush1.msra.mxu0 0.0
  %1444 = vmatprep.subr.mxu0 0.0
  %1445 = vmatpush1.msra.mxu0 0.0
  %1446 = vmatprep.subr.mxu0 0.0
  %1447 = vmatpush1.msra.mxu0 0.0
  %1448 = vmatprep.subr.mxu0 0.0
  %1449 = vmatpush1.msra.mxu0 0.0
  %1450 = vmatprep.subr.mxu0 0.0
  %1451 = vmatpush1.msra.mxu0 0.0
  %1452 = vmatprep.subr.mxu0 0.0
  %1453 = vmatpush1.msra.mxu0 0.0
  %1454 = vmatprep.subr.mxu0 0.0
  %1455 = vmatpush1.msra.mxu0 0.0
  %1456 = vmatprep.subr.mxu0 0.0
  %1457 = vmatpush1.msra.mxu0 0.0
  %1458 = vmatprep.mubr.f32.mxu0 0.0
  %1459 = vmatmul.mubr.f32.gmra.mrb[0].mxu0 %v1392
  %v1460 = vpop.f32.mrb[0].mxu0
  %v1461 = vadd.f32 0.0, %v1460
  %v1462 = vpop.f32.mrb[0].mxu0
  %1463 = vdwg.mxu0
  %v1465 = vrot.slane %v1461, 2
  %v1467 = vadd.f32 %v124, %v1465
  %v1468 = vxor.u32 %v1467, 2147483648
  %v1469 = vmul.f32 %v1468, 1.442695
  %v1470 = vpow.pop %v1469
  %v1471 = vadd.f32 %v1470, 1.0
  %v1472 = vrcp.pop %v1471
  %v1473 = vmul.f32 1.0, %v1472
  %v1474 = vtanh.pop %v1467
  %v1476 = vrot.slane %v1104, 6
  %v1478 = vmul.f32 %v1473, %v1476
  %1480 = vrot.lane.b32.xlu0 %v1474, 64
  %v1481 = vpop.permute.xlu0 %1480
  %v1483 = vmul.f32 %v1473, %v1481
  %1485 = vrot.lane.b32.xlu0 %v1483, 32
  %v1486 = vpop.permute.xlu0 %1485
  %v1488 = vadd.f32 %v1478, %v1486
  %v1489 = vtanh.pop %v1488
  %1491 = vrot.lane.b32.xlu0 %v1489, 64
  %v1492 = vpop.permute.xlu0 %1491
  %v1494 = vmul.f32 %v1473, %v1492
  %v1496 = vcombine.high %v1494, %v1494
  %v1498 = vunpack.c.l.s4 1966171168
  %v1499 = vunpack.c.0.s8 %v1498
  %v1500 = vlaneseq
  %v1501 = vshrl.u32 %v1500, 7
  %v1502 = vsub.s32 %v1499, %v1501
  %v1503 = vrot.slane %v1496, %v1502
  %v1504 = vcombine.high %v1503, %v1503
  %v1506 = vunpack.c.l.s4 1966171168
  %v1507 = vunpack.c.0.s8 %v1506
  %v1508 = vlaneseq
  %v1509 = vshrl.u32 %v1508, 7
  %v1510 = vsub.s32 %v1507, %v1509
  %v1511 = vrot.slane %v1503, %v1510
  %v1513 = vunpack.c.l.s4 1966171168
  %v1514 = vunpack.c.0.s8 %v1513
  %v1515 = vlaneseq
  %v1516 = vshrl.u32 %v1515, 7
  %v1517 = vsub.s32 %v1514, %v1516
  %v1518 = vrot.slane %v1504, %v1517
  %v1519 = vcombine.high %v1511, %v1511
  %v1520 = vcombine.high %v1518, %v1518
  %v1521 = vlaneseq
  %v1522 = vshrl.u32 %v1521, 7
  %v1523 = vsub.s32 0, %v1522
  %v1524 = vrot.slane %v1519, %v1523
  %v1525 = vlaneseq
  %v1526 = vshrl.u32 %v1525, 7
  %v1527 = vsub.s32 0, %v1526
  %v1528 = vrot.slane %v1520, %v1527
  %1529 = vrot.lane.b32.xlu0 %v1524, 32
  %v1530 = vpop.permute.xlu0 %1529
  %1531 = vrot.lane.b32.xlu0 %v1528, 32
  %v1532 = vpop.permute.xlu0 %1531
  %v1535 = vmul.f32 %v214, %v1530
  %v1536 = vmul.f32 %v219, %v1532
  %v1537 = vsel %vm50, %v1535, 0.0
  %1538 = vadd.xlane.f32.xlu0 %v1537
  %v1539 = vpop.xlane.xlu0 %1538
  %v1540 = vsel %vm50, %v1536, 0.0
  %1541 = vadd.xlane.f32.xlu0 %v1540
  %v1542 = vpop.xlane.xlu0 %1541
  %v1545 = vlaneseq
  %v1546 = vshrl.u32 %v1545, 7
  %v1547 = vsub.s32 %v388, %v1546
  %v1548 = vrot.slane %v1539, %v1547
  %v1549 = vlaneseq
  %v1550 = vshrl.u32 %v1549, 7
  %v1551 = vsub.s32 %v388, %v1550
  %v1552 = vrot.slane %v1542, %v1551
  %v1553 = vsel %vm397, %v1552, %v1548
  %v1555 = vsel %vm400, %v1553, -inf
  %1556 = vmax.xlane.f32.xlu0 %v1555
  %v1557 = vpop.xlane.xlu0 %1556
  %v1559 = vlaneseq
  %v1560 = vshrl.u32 %v1559, 7
  %v1561 = vsub.s32 0, %v1560
  %v1562 = vrot.slane %v1557, %v1561
  %v1563 = vlaneseq
  %v1564 = vshrl.u32 %v1563, 7
  %v1565 = vsub.s32 1, %v1564
  %v1566 = vrot.slane %v1557, %v1565
  %v1569 = vsub.f32 %v1539, %v1562
  %v1570 = vsub.f32 %v1542, %v1566
  %v1571 = vmul.f32 %v1569, 1.442695
  %v1572 = vpow.pop %v1571
  %v1573 = vmul.f32 %v1570, 1.442695
  %v1574 = vpow.pop %v1573
  %1577 = vset.pattern.permute.xlu0 0
  %1578 = vperm.xlu0 %1577, %v1572
  %v1579 = vpop.permute.xlu0 %1578
  %1580 = vset.pattern.permute.xlu0 0
  %1581 = vperm.xlu0 %1580, %v1574
  %v1582 = vpop.permute.xlu0 %1581
  %v1583 = vlaneseq
  %v1584 = vshrl.u32 %v1583, 7
  %v1585 = vsub.s32 %v388, %v1584
  %v1586 = vrot.slane %v1579, %v1585
  %v1587 = vlaneseq
  %v1588 = vshrl.u32 %v1587, 7
  %v1589 = vsub.s32 %v388, %v1588
  %v1590 = vrot.slane %v1582, %v1589
  %v1591 = vsel %vm397, %v1590, %v1586
  %v1593 = vsel %vm400, %v1591, 0.0
  %1594 = vadd.xlane.f32.xlu0 %v1593
  %v1595 = vpop.xlane.xlu0 %1594
  %v1596 = vrcp.pop %v1595
  %v1599 = vmul.f32 %v1579, %v35
  %v1600 = vmul.f32 %v1582, %v36
  %v1601 = vsel %vm140, %v1599, 0.0
  %v1602 = vrot.slane %v1601, 4
  %v1603 = vadd.f32 %v1601, %v1602
  %v1604 = vrot.slane %v1603, 2
  %v1605 = vadd.f32 %v1603, %v1604
  %v1606 = vrot.slane %v1605, 1
  %v1607 = vadd.f32 %v1605, %v1606
  %v1608 = vsel %vm140, %v1600, 0.0
  %v1609 = vrot.slane %v1608, 4
  %v1610 = vadd.f32 %v1608, %v1609
  %v1611 = vrot.slane %v1610, 2
  %v1612 = vadd.f32 %v1610, %v1611
  %v1613 = vrot.slane %v1612, 1
  %v1614 = vadd.f32 %v1612, %v1613
  %v1616 = vrot.slane %v1596, 1
  %v1619 = vmul.f32 %v1607, %v1596
  %v1620 = vmul.f32 %v1614, %v1616
  %v1623 = vrot.slane %v1620, 7
  %v1624 = vsel %vm397, %v1623, %v1619
  %v1625 = vsel %vm140, %v1624, 0
  %1627 = vmatprep.subr.mxu0 0.0
  %1628 = vmatpush1.msra.mxu0 %v234
  %1629 = vmatprep.subr.mxu0 0.0
  %1630 = vmatpush1.msra.mxu0 %v235
  %1631 = vmatprep.subr.mxu0 0.0
  %1632 = vmatpush1.msra.mxu0 %v236
  %1633 = vmatprep.subr.mxu0 0.0
  %1634 = vmatpush1.msra.mxu0 %v237
  %1635 = vmatprep.subr.mxu0 0.0
  %1636 = vmatpush1.msra.mxu0 %v238
  %1637 = vmatprep.subr.mxu0 0.0
  %1638 = vmatpush1.msra.mxu0 %v239
  %1639 = vmatprep.subr.mxu0 0.0
  %1640 = vmatpush1.msra.mxu0 %v240
  %1641 = vmatprep.subr.mxu0 0.0
  %1642 = vmatpush1.msra.mxu0 %v241
  %1643 = vmatprep.subr.mxu0 0.0
  %1644 = vmatpush1.msra.mxu0 0.0
  %1645 = vmatprep.subr.mxu0 0.0
  %1646 = vmatpush1.msra.mxu0 0.0
  %1647 = vmatprep.subr.mxu0 0.0
  %1648 = vmatpush1.msra.mxu0 0.0
  %1649 = vmatprep.subr.mxu0 0.0
  %1650 = vmatpush1.msra.mxu0 0.0
  %1651 = vmatprep.subr.mxu0 0.0
  %1652 = vmatpush1.msra.mxu0 0.0
  %1653 = vmatprep.subr.mxu0 0.0
  %1654 = vmatpush1.msra.mxu0 0.0
  %1655 = vmatprep.subr.mxu0 0.0
  %1656 = vmatpush1.msra.mxu0 0.0
  %1657 = vmatprep.subr.mxu0 0.0
  %1658 = vmatpush1.msra.mxu0 0.0
  %1659 = vmatprep.subr.mxu0 0.0
  %1660 = vmatpush1.msra.mxu0 0.0
  %1661 = vmatprep.subr.mxu0 0.0
  %1662 = vmatpush1.msra.mxu0 0.0
  %1663 = vmatprep.subr.mxu0 0.0
  %1664 = vmatpush1.msra.mxu0 0.0
  %1665 = vmatprep.subr.mxu0 0.0
  %1666 = vmatpush1.msra.mxu0 0.0
  %1667 = vmatprep.subr.mxu0 0.0
  %1668 = vmatpush1.msra.mxu0 0.0
  %1669 = vmatprep.subr.mxu0 0.0
  %1670 = vmatpush1.msra.mxu0 0.0
  %1671 = vmatprep.subr.mxu0 0.0
  %1672 = vmatpush1.msra.mxu0 0.0
  %1673 = vmatprep.subr.mxu0 0.0
  %1674 = vmatpush1.msra.mxu0 0.0
  %1675 = vmatprep.subr.mxu0 0.0
  %1676 = vmatpush1.msra.mxu0 0.0
  %1677 = vmatprep.subr.mxu0 0.0
  %1678 = vmatpush1.msra.mxu0 0.0
  %1679 = vmatprep.subr.mxu0 0.0
  %1680 = vmatpush1.msra.mxu0 0.0
  %1681 = vmatprep.subr.mxu0 0.0
  %1682 = vmatpush1.msra.mxu0 0.0
  %1683 = vmatprep.subr.mxu0 0.0
  %1684 = vmatpush1.msra.mxu0 0.0
  %1685 = vmatprep.subr.mxu0 0.0
  %1686 = vmatpush1.msra.mxu0 0.0
  %1687 = vmatprep.subr.mxu0 0.0
  %1688 = vmatpush1.msra.mxu0 0.0
  %1689 = vmatprep.subr.mxu0 0.0
  %1690 = vmatpush1.msra.mxu0 0.0
  %1691 = vmatprep.mubr.f32.mxu0 0.0
  %1692 = vmatmul.mubr.f32.gmra.mrb[0].mxu0 %v1625
  %v1693 = vpop.f32.mrb[0].mxu0
  %v1694 = vadd.f32 0.0, %v1693
  %v1695 = vpop.f32.mrb[0].mxu0
  %1696 = vdwg.mxu0
  %v1697 = vrot.slane %v1494, 6
  %1698 = vrot.lane.b32.xlu0 %v1697, 32
  %v1699 = vpop.permute.xlu0 %1698
  %v1700 = vsel %vm50, %v1699, 0
  %1702 = vmatprep.subr.mxu0 0.0
  %1703 = vmatpush1.msra.mxu0 %v230
  %1704 = vmatprep.subr.mxu0 0.0
  %1705 = vmatpush1.msra.mxu0 %v231
  %1706 = vmatprep.subr.mxu0 0.0
  %1707 = vmatpush1.msra.mxu0 %v232
  %1708 = vmatprep.subr.mxu0 0.0
  %1709 = vmatpush1.msra.mxu0 %v233
  %1710 = vmatprep.subr.mxu0 0.0
  %1711 = vmatpush1.msra.mxu0 0.0
  %1712 = vmatprep.subr.mxu0 0.0
  %1713 = vmatpush1.msra.mxu0 0.0
  %1714 = vmatprep.subr.mxu0 0.0
  %1715 = vmatpush1.msra.mxu0 0.0
  %1716 = vmatprep.subr.mxu0 0.0
  %1717 = vmatpush1.msra.mxu0 0.0
  %1718 = vmatprep.subr.mxu0 0.0
  %1719 = vmatpush1.msra.mxu0 0.0
  %1720 = vmatprep.subr.mxu0 0.0
  %1721 = vmatpush1.msra.mxu0 0.0
  %1722 = vmatprep.subr.mxu0 0.0
  %1723 = vmatpush1.msra.mxu0 0.0
  %1724 = vmatprep.subr.mxu0 0.0
  %1725 = vmatpush1.msra.mxu0 0.0
  %1726 = vmatprep.subr.mxu0 0.0
  %1727 = vmatpush1.msra.mxu0 0.0
  %1728 = vmatprep.subr.mxu0 0.0
  %1729 = vmatpush1.msra.mxu0 0.0
  %1730 = vmatprep.subr.mxu0 0.0
  %1731 = vmatpush1.msra.mxu0 0.0
  %1732 = vmatprep.subr.mxu0 0.0
  %1733 = vmatpush1.msra.mxu0 0.0
  %1734 = vmatprep.subr.mxu0 0.0
  %1735 = vmatpush1.msra.mxu0 0.0
  %1736 = vmatprep.subr.mxu0 0.0
  %1737 = vmatpush1.msra.mxu0 0.0
  %1738 = vmatprep.subr.mxu0 0.0
  %1739 = vmatpush1.msra.mxu0 0.0
  %1740 = vmatprep.subr.mxu0 0.0
  %1741 = vmatpush1.msra.mxu0 0.0
  %1742 = vmatprep.subr.mxu0 0.0
  %1743 = vmatpush1.msra.mxu0 0.0
  %1744 = vmatprep.subr.mxu0 0.0
  %1745 = vmatpush1.msra.mxu0 0.0
  %1746 = vmatprep.subr.mxu0 0.0
  %1747 = vmatpush1.msra.mxu0 0.0
  %1748 = vmatprep.subr.mxu0 0.0
  %1749 = vmatpush1.msra.mxu0 0.0
  %1750 = vmatprep.subr.mxu0 0.0
  %1751 = vmatpush1.msra.mxu0 0.0
  %1752 = vmatprep.subr.mxu0 0.0
  %1753 = vmatpush1.msra.mxu0 0.0
  %1754 = vmatprep.subr.mxu0 0.0
  %1755 = vmatpush1.msra.mxu0 0.0
  %1756 = vmatprep.subr.mxu0 0.0
  %1757 = vmatpush1.msra.mxu0 0.0
  %1758 = vmatprep.subr.mxu0 0.0
  %1759 = vmatpush1.msra.mxu0 0.0
  %1760 = vmatprep.subr.mxu0 0.0
  %1761 = vmatpush1.msra.mxu0 0.0
  %1762 = vmatprep.subr.mxu0 0.0
  %1763 = vmatpush1.msra.mxu0 0.0
  %1764 = vmatprep.subr.mxu0 0.0
  %1765 = vmatpush1.msra.mxu0 0.0
  %1766 = vmatprep.mubr.f32.mxu0 0.0
  %1767 = vmatmul.mubr.f32.gmra.mrb[0].mxu0 %v1700
  %v1768 = vpop.f32.mrb[0].mxu0
  %v1769 = vadd.f32 %v1694, %v1768
  %v1770 = vpop.f32.mrb[0].mxu0
  %1771 = vdwg.mxu0
  %v1772 = vtanh.pop %v1769
  %1773 = vrot.lane.b32.xlu0 %v1697, 64
  %v1774 = vpop.permute.xlu0 %1773
  %v1776 = vsel %vm50, %v1772, %v1774
  %v1778 = vsel %vm140, %v1776, 0
  %1780 = vmatprep.subr.mxu0 0.0
  %1781 = vmatpush1.msra.mxu0 %v222
  %1782 = vmatprep.subr.mxu0 0.0
  %1783 = vmatpush1.msra.mxu0 %v223
  %1784 = vmatprep.subr.mxu0 0.0
  %1785 = vmatpush1.msra.mxu0 %v224
  %1786 = vmatprep.subr.mxu0 0.0
  %1787 = vmatpush1.msra.mxu0 %v225
  %1788 = vmatprep.subr.mxu0 0.0
  %1789 = vmatpush1.msra.mxu0 %v226
  %1790 = vmatprep.subr.mxu0 0.0
  %1791 = vmatpush1.msra.mxu0 %v227
  %1792 = vmatprep.subr.mxu0 0.0
  %1793 = vmatpush1.msra.mxu0 %v228
  %1794 = vmatprep.subr.mxu0 0.0
  %1795 = vmatpush1.msra.mxu0 %v229
  %1796 = vmatprep.subr.mxu0 0.0
  %1797 = vmatpush1.msra.mxu0 0.0
  %1798 = vmatprep.subr.mxu0 0.0
  %1799 = vmatpush1.msra.mxu0 0.0
  %1800 = vmatprep.subr.mxu0 0.0
  %1801 = vmatpush1.msra.mxu0 0.0
  %1802 = vmatprep.subr.mxu0 0.0
  %1803 = vmatpush1.msra.mxu0 0.0
  %1804 = vmatprep.subr.mxu0 0.0
  %1805 = vmatpush1.msra.mxu0 0.0
  %1806 = vmatprep.subr.mxu0 0.0
  %1807 = vmatpush1.msra.mxu0 0.0
  %1808 = vmatprep.subr.mxu0 0.0
  %1809 = vmatpush1.msra.mxu0 0.0
  %1810 = vmatprep.subr.mxu0 0.0
  %1811 = vmatpush1.msra.mxu0 0.0
  %1812 = vmatprep.subr.mxu0 0.0
  %1813 = vmatpush1.msra.mxu0 0.0
  %1814 = vmatprep.subr.mxu0 0.0
  %1815 = vmatpush1.msra.mxu0 0.0
  %1816 = vmatprep.subr.mxu0 0.0
  %1817 = vmatpush1.msra.mxu0 0.0
  %1818 = vmatprep.subr.mxu0 0.0
  %1819 = vmatpush1.msra.mxu0 0.0
  %1820 = vmatprep.subr.mxu0 0.0
  %1821 = vmatpush1.msra.mxu0 0.0
  %1822 = vmatprep.subr.mxu0 0.0
  %1823 = vmatpush1.msra.mxu0 0.0
  %1824 = vmatprep.subr.mxu0 0.0
  %1825 = vmatpush1.msra.mxu0 0.0
  %1826 = vmatprep.subr.mxu0 0.0
  %1827 = vmatpush1.msra.mxu0 0.0
  %1828 = vmatprep.subr.mxu0 0.0
  %1829 = vmatpush1.msra.mxu0 0.0
  %1830 = vmatprep.subr.mxu0 0.0
  %1831 = vmatpush1.msra.mxu0 0.0
  %1832 = vmatprep.subr.mxu0 0.0
  %1833 = vmatpush1.msra.mxu0 0.0
  %1834 = vmatprep.subr.mxu0 0.0
  %1835 = vmatpush1.msra.mxu0 0.0
  %1836 = vmatprep.subr.mxu0 0.0
  %1837 = vmatpush1.msra.mxu0 0.0
  %1838 = vmatprep.subr.mxu0 0.0
  %1839 = vmatpush1.msra.mxu0 0.0
  %1840 = vmatprep.subr.mxu0 0.0
  %1841 = vmatpush1.msra.mxu0 0.0
  %1842 = vmatprep.subr.mxu0 0.0
  %1843 = vmatpush1.msra.mxu0 0.0
  %1844 = vmatprep.mubr.f32.mxu0 0.0
  %1845 = vmatmul.mubr.f32.gmra.mrb[0].mxu0 %v1778
  %v1846 = vpop.f32.mrb[0].mxu0
  %v1847 = vadd.f32 0.0, %v1846
  %v1848 = vpop.f32.mrb[0].mxu0
  %1849 = vdwg.mxu0
  %v1850 = vadd.f32 %v129, %v1847
  %v1851 = vxor.u32 %v1850, 2147483648
  %v1852 = vmul.f32 %v1851, 1.442695
  %v1853 = vpow.pop %v1852
  %v1854 = vadd.f32 %v1853, 1.0
  %v1855 = vrcp.pop %v1854
  %v1856 = vmul.f32 1.0, %v1855
  %v1857 = vtanh.pop %v1850
  %v1859 = vrot.slane %v1488, 6
  %v1861 = vmul.f32 %v1856, %v1859
  %1863 = vrot.lane.b32.xlu0 %v1857, 64
  %v1864 = vpop.permute.xlu0 %1863
  %v1866 = vmul.f32 %v1856, %v1864
  %1868 = vrot.lane.b32.xlu0 %v1866, 32
  %v1869 = vpop.permute.xlu0 %1868
  %v1871 = vadd.f32 %v1861, %v1869
  %v1872 = vtanh.pop %v1871
  %1874 = vrot.lane.b32.xlu0 %v1872, 64
  %v1875 = vpop.permute.xlu0 %1874
  %v1877 = vmul.f32 %v1856, %v1875
  %v1880 = vunpack.c.l.s4 1966171168
  %v1881 = vunpack.c.0.s8 %v1880
  %v1882 = vlaneseq
  %v1883 = vshrl.u32 %v1882, 7
  %v1884 = vsub.s32 %v1881, %v1883
  %v1885 = vrot.slane %v1877, %v1884
  %v1886 = vcombine.high %v1885, %v1885
  %v1888 = vunpack.c.l.s4 1966171168
  %v1889 = vunpack.c.0.s8 %v1888
  %v1890 = vlaneseq
  %v1891 = vshrl.u32 %v1890, 7
  %v1892 = vsub.s32 %v1889, %v1891
  %v1893 = vrot.slane %v1885, %v1892
  %v1895 = vunpack.c.l.s4 1966171168
  %v1896 = vunpack.c.0.s8 %v1895
  %v1897 = vlaneseq
  %v1898 = vshrl.u32 %v1897, 7
  %v1899 = vsub.s32 %v1896, %v1898
  %v1900 = vrot.slane %v1886, %v1899
  %v1901 = vlaneseq
  %v1902 = vshrl.u32 %v1901, 7
  %v1903 = vsub.s32 0, %v1902
  %v1904 = vrot.slane %v1893, %v1903
  %v1905 = vlaneseq
  %v1906 = vshrl.u32 %v1905, 7
  %v1907 = vsub.s32 0, %v1906
  %v1908 = vrot.slane %v1900, %v1907
  %1909 = vrot.lane.b32.xlu0 %v1904, 32
  %v1910 = vpop.permute.xlu0 %1909
  %1911 = vrot.lane.b32.xlu0 %v1908, 32
  %v1912 = vpop.permute.xlu0 %1911
  %v1915 = vmul.f32 %v214, %v1910
  %v1916 = vmul.f32 %v219, %v1912
  %v1917 = vsel %vm50, %v1915, 0.0
  %1918 = vadd.xlane.f32.xlu0 %v1917
  %v1919 = vpop.xlane.xlu0 %1918
  %v1920 = vsel %vm50, %v1916, 0.0
  %1921 = vadd.xlane.f32.xlu0 %v1920
  %v1922 = vpop.xlane.xlu0 %1921
  %v1925 = vlaneseq
  %v1926 = vshrl.u32 %v1925, 7
  %v1927 = vsub.s32 %v388, %v1926
  %v1928 = vrot.slane %v1919, %v1927
  %v1929 = vlaneseq
  %v1930 = vshrl.u32 %v1929, 7
  %v1931 = vsub.s32 %v388, %v1930
  %v1932 = vrot.slane %v1922, %v1931
  %v1933 = vsel %vm397, %v1932, %v1928
  %v1935 = vsel %vm400, %v1933, -inf
  %1936 = vmax.xlane.f32.xlu0 %v1935
  %v1937 = vpop.xlane.xlu0 %1936
  %v1939 = vlaneseq
  %v1940 = vshrl.u32 %v1939, 7
  %v1941 = vsub.s32 0, %v1940
  %v1942 = vrot.slane %v1937, %v1941
  %v1943 = vlaneseq
  %v1944 = vshrl.u32 %v1943, 7
  %v1945 = vsub.s32 1, %v1944
  %v1946 = vrot.slane %v1937, %v1945
  %v1949 = vsub.f32 %v1919, %v1942
  %v1950 = vsub.f32 %v1922, %v1946
  %v1951 = vmul.f32 %v1949, 1.442695
  %v1952 = vpow.pop %v1951
  %v1953 = vmul.f32 %v1950, 1.442695
  %v1954 = vpow.pop %v1953
  %1957 = vset.pattern.permute.xlu0 0
  %1958 = vperm.xlu0 %1957, %v1952
  %v1959 = vpop.permute.xlu0 %1958
  %1960 = vset.pattern.permute.xlu0 0
  %1961 = vperm.xlu0 %1960, %v1954
  %v1962 = vpop.permute.xlu0 %1961
  %v1963 = vlaneseq
  %v1964 = vshrl.u32 %v1963, 7
  %v1965 = vsub.s32 %v388, %v1964
  %v1966 = vrot.slane %v1959, %v1965
  %v1967 = vlaneseq
  %v1968 = vshrl.u32 %v1967, 7
  %v1969 = vsub.s32 %v388, %v1968
  %v1970 = vrot.slane %v1962, %v1969
  %v1971 = vsel %vm397, %v1970, %v1966
  %v1973 = vsel %vm400, %v1971, 0.0
  %1974 = vadd.xlane.f32.xlu0 %v1973
  %v1975 = vpop.xlane.xlu0 %1974
  %v1976 = vrcp.pop %v1975
  %v1979 = vmul.f32 %v1959, %v35
  %v1980 = vmul.f32 %v1962, %v36
  %v1981 = vsel %vm140, %v1979, 0.0
  %v1982 = vrot.slane %v1981, 4
  %v1983 = vadd.f32 %v1981, %v1982
  %v1984 = vrot.slane %v1983, 2
  %v1985 = vadd.f32 %v1983, %v1984
  %v1986 = vrot.slane %v1985, 1
  %v1987 = vadd.f32 %v1985, %v1986
  %v1988 = vsel %vm140, %v1980, 0.0
  %v1989 = vrot.slane %v1988, 4
  %v1990 = vadd.f32 %v1988, %v1989
  %v1991 = vrot.slane %v1990, 2
  %v1992 = vadd.f32 %v1990, %v1991
  %v1993 = vrot.slane %v1992, 1
  %v1994 = vadd.f32 %v1992, %v1993
  %v1996 = vrot.slane %v1976, 1
  %v1999 = vmul.f32 %v1987, %v1976
  %v2000 = vmul.f32 %v1994, %v1996
  %v2003 = vrot.slane %v2000, 7
  %v2004 = vsel %vm397, %v2003, %v1999
  %v2005 = vsel %vm140, %v2004, 0
  %2007 = vmatprep.subr.mxu0 0.0
  %2008 = vmatpush1.msra.mxu0 %v234
  %2009 = vmatprep.subr.mxu0 0.0
  %2010 = vmatpush1.msra.mxu0 %v235
  %2011 = vmatprep.subr.mxu0 0.0
  %2012 = vmatpush1.msra.mxu0 %v236
  %2013 = vmatprep.subr.mxu0 0.0
  %2014 = vmatpush1.msra.mxu0 %v237
  %2015 = vmatprep.subr.mxu0 0.0
  %2016 = vmatpush1.msra.mxu0 %v238
  %2017 = vmatprep.subr.mxu0 0.0
  %2018 = vmatpush1.msra.mxu0 %v239
  %2019 = vmatprep.subr.mxu0 0.0
  %2020 = vmatpush1.msra.mxu0 %v240
  %2021 = vmatprep.subr.mxu0 0.0
  %2022 = vmatpush1.msra.mxu0 %v241
  %2023 = vmatprep.subr.mxu0 0.0
  %2024 = vmatpush1.msra.mxu0 0.0
  %2025 = vmatprep.subr.mxu0 0.0
  %2026 = vmatpush1.msra.mxu0 0.0
  %2027 = vmatprep.subr.mxu0 0.0
  %2028 = vmatpush1.msra.mxu0 0.0
  %2029 = vmatprep.subr.mxu0 0.0
  %2030 = vmatpush1.msra.mxu0 0.0
  %2031 = vmatprep.subr.mxu0 0.0
  %2032 = vmatpush1.msra.mxu0 0.0
  %2033 = vmatprep.subr.mxu0 0.0
  %2034 = vmatpush1.msra.mxu0 0.0
  %2035 = vmatprep.subr.mxu0 0.0
  %2036 = vmatpush1.msra.mxu0 0.0
  %2037 = vmatprep.subr.mxu0 0.0
  %2038 = vmatpush1.msra.mxu0 0.0
  %2039 = vmatprep.subr.mxu0 0.0
  %2040 = vmatpush1.msra.mxu0 0.0
  %2041 = vmatprep.subr.mxu0 0.0
  %2042 = vmatpush1.msra.mxu0 0.0
  %2043 = vmatprep.subr.mxu0 0.0
  %2044 = vmatpush1.msra.mxu0 0.0
  %2045 = vmatprep.subr.mxu0 0.0
  %2046 = vmatpush1.msra.mxu0 0.0
  %2047 = vmatprep.subr.mxu0 0.0
  %2048 = vmatpush1.msra.mxu0 0.0
  %2049 = vmatprep.subr.mxu0 0.0
  %2050 = vmatpush1.msra.mxu0 0.0
  %2051 = vmatprep.subr.mxu0 0.0
  %2052 = vmatpush1.msra.mxu0 0.0
  %2053 = vmatprep.subr.mxu0 0.0
  %2054 = vmatpush1.msra.mxu0 0.0
  %2055 = vmatprep.subr.mxu0 0.0
  %2056 = vmatpush1.msra.mxu0 0.0
  %2057 = vmatprep.subr.mxu0 0.0
  %2058 = vmatpush1.msra.mxu0 0.0
  %2059 = vmatprep.subr.mxu0 0.0
  %2060 = vmatpush1.msra.mxu0 0.0
  %2061 = vmatprep.subr.mxu0 0.0
  %2062 = vmatpush1.msra.mxu0 0.0
  %2063 = vmatprep.subr.mxu0 0.0
  %2064 = vmatpush1.msra.mxu0 0.0
  %2065 = vmatprep.subr.mxu0 0.0
  %2066 = vmatpush1.msra.mxu0 0.0
  %2067 = vmatprep.subr.mxu0 0.0
  %2068 = vmatpush1.msra.mxu0 0.0
  %2069 = vmatprep.subr.mxu0 0.0
  %2070 = vmatpush1.msra.mxu0 0.0
  %2071 = vmatprep.mubr.f32.mxu0 0.0
  %2072 = vmatmul.mubr.f32.gmra.mrb[0].mxu0 %v2005
  %v2073 = vpop.f32.mrb[0].mxu0
  %v2074 = vadd.f32 0.0, %v2073
  %v2075 = vpop.f32.mrb[0].mxu0
  %2076 = vdwg.mxu0
  %2077 = vrot.lane.b32.xlu0 %v1877, 32
  %v2078 = vpop.permute.xlu0 %2077
  %v2079 = vsel %vm50, %v2078, 0
  %2081 = vmatprep.subr.mxu0 0.0
  %2082 = vmatpush1.msra.mxu0 %v230
  %2083 = vmatprep.subr.mxu0 0.0
  %2084 = vmatpush1.msra.mxu0 %v231
  %2085 = vmatprep.subr.mxu0 0.0
  %2086 = vmatpush1.msra.mxu0 %v232
  %2087 = vmatprep.subr.mxu0 0.0
  %2088 = vmatpush1.msra.mxu0 %v233
  %2089 = vmatprep.subr.mxu0 0.0
  %2090 = vmatpush1.msra.mxu0 0.0
  %2091 = vmatprep.subr.mxu0 0.0
  %2092 = vmatpush1.msra.mxu0 0.0
  %2093 = vmatprep.subr.mxu0 0.0
  %2094 = vmatpush1.msra.mxu0 0.0
  %2095 = vmatprep.subr.mxu0 0.0
  %2096 = vmatpush1.msra.mxu0 0.0
  %2097 = vmatprep.subr.mxu0 0.0
  %2098 = vmatpush1.msra.mxu0 0.0
  %2099 = vmatprep.subr.mxu0 0.0
  %2100 = vmatpush1.msra.mxu0 0.0
  %2101 = vmatprep.subr.mxu0 0.0
  %2102 = vmatpush1.msra.mxu0 0.0
  %2103 = vmatprep.subr.mxu0 0.0
  %2104 = vmatpush1.msra.mxu0 0.0
  %2105 = vmatprep.subr.mxu0 0.0
  %2106 = vmatpush1.msra.mxu0 0.0
  %2107 = vmatprep.subr.mxu0 0.0
  %2108 = vmatpush1.msra.mxu0 0.0
  %2109 = vmatprep.subr.mxu0 0.0
  %2110 = vmatpush1.msra.mxu0 0.0
  %2111 = vmatprep.subr.mxu0 0.0
  %2112 = vmatpush1.msra.mxu0 0.0
  %2113 = vmatprep.subr.mxu0 0.0
  %2114 = vmatpush1.msra.mxu0 0.0
  %2115 = vmatprep.subr.mxu0 0.0
  %2116 = vmatpush1.msra.mxu0 0.0
  %2117 = vmatprep.subr.mxu0 0.0
  %2118 = vmatpush1.msra.mxu0 0.0
  %2119 = vmatprep.subr.mxu0 0.0
  %2120 = vmatpush1.msra.mxu0 0.0
  %2121 = vmatprep.subr.mxu0 0.0
  %2122 = vmatpush1.msra.mxu0 0.0
  %2123 = vmatprep.subr.mxu0 0.0
  %2124 = vmatpush1.msra.mxu0 0.0
  %2125 = vmatprep.subr.mxu0 0.0
  %2126 = vmatpush1.msra.mxu0 0.0
  %2127 = vmatprep.subr.mxu0 0.0
  %2128 = vmatpush1.msra.mxu0 0.0
  %2129 = vmatprep.subr.mxu0 0.0
  %2130 = vmatpush1.msra.mxu0 0.0
  %2131 = vmatprep.subr.mxu0 0.0
  %2132 = vmatpush1.msra.mxu0 0.0
  %2133 = vmatprep.subr.mxu0 0.0
  %2134 = vmatpush1.msra.mxu0 0.0
  %2135 = vmatprep.subr.mxu0 0.0
  %2136 = vmatpush1.msra.mxu0 0.0
  %2137 = vmatprep.subr.mxu0 0.0
  %2138 = vmatpush1.msra.mxu0 0.0
  %2139 = vmatprep.subr.mxu0 0.0
  %2140 = vmatpush1.msra.mxu0 0.0
  %2141 = vmatprep.subr.mxu0 0.0
  %2142 = vmatpush1.msra.mxu0 0.0
  %2143 = vmatprep.subr.mxu0 0.0
  %2144 = vmatpush1.msra.mxu0 0.0
  %2145 = vmatprep.mubr.f32.mxu0 0.0
  %2146 = vmatmul.mubr.f32.gmra.mrb[0].mxu0 %v2079
  %v2147 = vpop.f32.mrb[0].mxu0
  %v2148 = vadd.f32 %v2074, %v2147
  %v2149 = vpop.f32.mrb[0].mxu0
  %2150 = vdwg.mxu0
  %v2151 = vtanh.pop %v2148
  %2152 = vrot.lane.b32.xlu0 %v1877, 64
  %v2153 = vpop.permute.xlu0 %2152
  %v2155 = vsel %vm50, %v2151, %v2153
  %v2157 = vsel %vm140, %v2155, 0
  %2159 = vmatprep.subr.mxu0 0.0
  %2160 = vmatpush1.msra.mxu0 %v222
  %2161 = vmatprep.subr.mxu0 0.0
  %2162 = vmatpush1.msra.mxu0 %v223
  %2163 = vmatprep.subr.mxu0 0.0
  %2164 = vmatpush1.msra.mxu0 %v224
  %2165 = vmatprep.subr.mxu0 0.0
  %2166 = vmatpush1.msra.mxu0 %v225
  %2167 = vmatprep.subr.mxu0 0.0
  %2168 = vmatpush1.msra.mxu0 %v226
  %2169 = vmatprep.subr.mxu0 0.0
  %2170 = vmatpush1.msra.mxu0 %v227
  %2171 = vmatprep.subr.mxu0 0.0
  %2172 = vmatpush1.msra.mxu0 %v228
  %2173 = vmatprep.subr.mxu0 0.0
  %2174 = vmatpush1.msra.mxu0 %v229
  %2175 = vmatprep.subr.mxu0 0.0
  %2176 = vmatpush1.msra.mxu0 0.0
  %2177 = vmatprep.subr.mxu0 0.0
  %2178 = vmatpush1.msra.mxu0 0.0
  %2179 = vmatprep.subr.mxu0 0.0
  %2180 = vmatpush1.msra.mxu0 0.0
  %2181 = vmatprep.subr.mxu0 0.0
  %2182 = vmatpush1.msra.mxu0 0.0
  %2183 = vmatprep.subr.mxu0 0.0
  %2184 = vmatpush1.msra.mxu0 0.0
  %2185 = vmatprep.subr.mxu0 0.0
  %2186 = vmatpush1.msra.mxu0 0.0
  %2187 = vmatprep.subr.mxu0 0.0
  %2188 = vmatpush1.msra.mxu0 0.0
  %2189 = vmatprep.subr.mxu0 0.0
  %2190 = vmatpush1.msra.mxu0 0.0
  %2191 = vmatprep.subr.mxu0 0.0
  %2192 = vmatpush1.msra.mxu0 0.0
  %2193 = vmatprep.subr.mxu0 0.0
  %2194 = vmatpush1.msra.mxu0 0.0
  %2195 = vmatprep.subr.mxu0 0.0
  %2196 = vmatpush1.msra.mxu0 0.0
  %2197 = vmatprep.subr.mxu0 0.0
  %2198 = vmatpush1.msra.mxu0 0.0
  %2199 = vmatprep.subr.mxu0 0.0
  %2200 = vmatpush1.msra.mxu0 0.0
  %2201 = vmatprep.subr.mxu0 0.0
  %2202 = vmatpush1.msra.mxu0 0.0
  %2203 = vmatprep.subr.mxu0 0.0
  %2204 = vmatpush1.msra.mxu0 0.0
  %2205 = vmatprep.subr.mxu0 0.0
  %2206 = vmatpush1.msra.mxu0 0.0
  %2207 = vmatprep.subr.mxu0 0.0
  %2208 = vmatpush1.msra.mxu0 0.0
  %2209 = vmatprep.subr.mxu0 0.0
  %2210 = vmatpush1.msra.mxu0 0.0
  %2211 = vmatprep.subr.mxu0 0.0
  %2212 = vmatpush1.msra.mxu0 0.0
  %2213 = vmatprep.subr.mxu0 0.0
  %2214 = vmatpush1.msra.mxu0 0.0
  %2215 = vmatprep.subr.mxu0 0.0
  %2216 = vmatpush1.msra.mxu0 0.0
  %2217 = vmatprep.subr.mxu0 0.0
  %2218 = vmatpush1.msra.mxu0 0.0
  %2219 = vmatprep.subr.mxu0 0.0
  %2220 = vmatpush1.msra.mxu0 0.0
  %2221 = vmatprep.subr.mxu0 0.0
  %2222 = vmatpush1.msra.mxu0 0.0
  %2223 = vmatprep.mubr.f32.mxu0 0.0
  %2224 = vmatmul.mubr.f32.gmra.mrb[0].mxu0 %v2157
  %v2225 = vpop.f32.mrb[0].mxu0
  %v2226 = vadd.f32 0.0, %v2225
  %v2227 = vpop.f32.mrb[0].mxu0
  %2228 = vdwg.mxu0
  %v2230 = vrot.slane %v2226, 6
  %v2232 = vadd.f32 %v129, %v2230
  %v2233 = vxor.u32 %v2232, 2147483648
  %v2234 = vmul.f32 %v2233, 1.442695
  %v2235 = vpow.pop %v2234
  %v2236 = vadd.f32 %v2235, 1.0
  %v2237 = vrcp.pop %v2236
  %v2238 = vmul.f32 1.0, %v2237
  %v2239 = vtanh.pop %v2232
  %v2241 = vrot.slane %v1871, 6
  %v2243 = vmul.f32 %v2238, %v2241
  %2245 = vrot.lane.b32.xlu0 %v2239, 64
  %v2246 = vpop.permute.xlu0 %2245
  %v2248 = vmul.f32 %v2238, %v2246
  %2250 = vrot.lane.b32.xlu0 %v2248, 32
  %v2251 = vpop.permute.xlu0 %2250
  %v2253 = vadd.f32 %v2243, %v2251
  %v2254 = vtanh.pop %v2253
  %2256 = vrot.lane.b32.xlu0 %v2254, 64
  %v2257 = vpop.permute.xlu0 %2256
  %v2259 = vmul.f32 %v2238, %v2257
  %v2262 = vunpack.c.l.s4 1966171168
  %v2263 = vunpack.c.0.s8 %v2262
  %v2264 = vlaneseq
  %v2265 = vshrl.u32 %v2264, 7
  %v2266 = vsub.s32 %v2263, %v2265
  %v2267 = vrot.slane %v2259, %v2266
  %v2268 = vcombine.high %v2267, %v2267
  %v2270 = vunpack.c.l.s4 1966171168
  %v2271 = vunpack.c.0.s8 %v2270
  %v2272 = vlaneseq
  %v2273 = vshrl.u32 %v2272, 7
  %v2274 = vsub.s32 %v2271, %v2273
  %v2275 = vrot.slane %v2267, %v2274
  %v2277 = vunpack.c.l.s4 1966171168
  %v2278 = vunpack.c.0.s8 %v2277
  %v2279 = vlaneseq
  %v2280 = vshrl.u32 %v2279, 7
  %v2281 = vsub.s32 %v2278, %v2280
  %v2282 = vrot.slane %v2268, %v2281
  %v2283 = vcombine.high %v2275, %v2275
  %v2284 = vcombine.high %v2282, %v2282
  %v2285 = vlaneseq
  %v2286 = vshrl.u32 %v2285, 7
  %v2287 = vsub.s32 0, %v2286
  %v2288 = vrot.slane %v2283, %v2287
  %v2289 = vlaneseq
  %v2290 = vshrl.u32 %v2289, 7
  %v2291 = vsub.s32 0, %v2290
  %v2292 = vrot.slane %v2284, %v2291
  %2293 = vrot.lane.b32.xlu0 %v2288, 32
  %v2294 = vpop.permute.xlu0 %2293
  %2295 = vrot.lane.b32.xlu0 %v2292, 32
  %v2296 = vpop.permute.xlu0 %2295
  %v2299 = vmul.f32 %v214, %v2294
  %v2300 = vmul.f32 %v219, %v2296
  %v2301 = vsel %vm50, %v2299, 0.0
  %2302 = vadd.xlane.f32.xlu0 %v2301
  %v2303 = vpop.xlane.xlu0 %2302
  %v2304 = vsel %vm50, %v2300, 0.0
  %2305 = vadd.xlane.f32.xlu0 %v2304
  %v2306 = vpop.xlane.xlu0 %2305
  %v2309 = vlaneseq
  %v2310 = vshrl.u32 %v2309, 7
  %v2311 = vsub.s32 %v388, %v2310
  %v2312 = vrot.slane %v2303, %v2311
  %v2313 = vlaneseq
  %v2314 = vshrl.u32 %v2313, 7
  %v2315 = vsub.s32 %v388, %v2314
  %v2316 = vrot.slane %v2306, %v2315
  %v2317 = vsel %vm397, %v2316, %v2312
  %v2319 = vsel %vm400, %v2317, -inf
  %2320 = vmax.xlane.f32.xlu0 %v2319
  %v2321 = vpop.xlane.xlu0 %2320
  %v2323 = vlaneseq
  %v2324 = vshrl.u32 %v2323, 7
  %v2325 = vsub.s32 0, %v2324
  %v2326 = vrot.slane %v2321, %v2325
  %v2327 = vlaneseq
  %v2328 = vshrl.u32 %v2327, 7
  %v2329 = vsub.s32 1, %v2328
  %v2330 = vrot.slane %v2321, %v2329
  %v2333 = vsub.f32 %v2303, %v2326
  %v2334 = vsub.f32 %v2306, %v2330
  %v2335 = vmul.f32 %v2333, 1.442695
  %v2336 = vpow.pop %v2335
  %v2337 = vmul.f32 %v2334, 1.442695
  %v2338 = vpow.pop %v2337
  %2341 = vset.pattern.permute.xlu0 0
  %2342 = vperm.xlu0 %2341, %v2336
  %v2343 = vpop.permute.xlu0 %2342
  %2344 = vset.pattern.permute.xlu0 0
  %2345 = vperm.xlu0 %2344, %v2338
  %v2346 = vpop.permute.xlu0 %2345
  %v2347 = vlaneseq
  %v2348 = vshrl.u32 %v2347, 7
  %v2349 = vsub.s32 %v388, %v2348
  %v2350 = vrot.slane %v2343, %v2349
  %v2351 = vlaneseq
  %v2352 = vshrl.u32 %v2351, 7
  %v2353 = vsub.s32 %v388, %v2352
  %v2354 = vrot.slane %v2346, %v2353
  %v2355 = vsel %vm397, %v2354, %v2350
  %v2357 = vsel %vm400, %v2355, 0.0
  %2358 = vadd.xlane.f32.xlu0 %v2357
  %v2359 = vpop.xlane.xlu0 %2358
  %v2360 = vrcp.pop %v2359
  %v2363 = vmul.f32 %v2343, %v35
  %v2364 = vmul.f32 %v2346, %v36
  %v2365 = vsel %vm140, %v2363, 0.0
  %v2366 = vrot.slane %v2365, 4
  %v2367 = vadd.f32 %v2365, %v2366
  %v2368 = vrot.slane %v2367, 2
  %v2369 = vadd.f32 %v2367, %v2368
  %v2370 = vrot.slane %v2369, 1
  %v2371 = vadd.f32 %v2369, %v2370
  %v2372 = vsel %vm140, %v2364, 0.0
  %v2373 = vrot.slane %v2372, 4
  %v2374 = vadd.f32 %v2372, %v2373
  %v2375 = vrot.slane %v2374, 2
  %v2376 = vadd.f32 %v2374, %v2375
  %v2377 = vrot.slane %v2376, 1
  %v2378 = vadd.f32 %v2376, %v2377
  %v2380 = vrot.slane %v2360, 1
  %v2383 = vmul.f32 %v2371, %v2360
  %v2384 = vmul.f32 %v2378, %v2380
  %v2387 = vrot.slane %v2384, 7
  %v2388 = vsel %vm397, %v2387, %v2383
  %v2389 = vsel %vm140, %v2388, 0
  %2391 = vmatprep.subr.mxu0 0.0
  %2392 = vmatpush1.msra.mxu0 %v234
  %2393 = vmatprep.subr.mxu0 0.0
  %2394 = vmatpush1.msra.mxu0 %v235
  %2395 = vmatprep.subr.mxu0 0.0
  %2396 = vmatpush1.msra.mxu0 %v236
  %2397 = vmatprep.subr.mxu0 0.0
  %2398 = vmatpush1.msra.mxu0 %v237
  %2399 = vmatprep.subr.mxu0 0.0
  %2400 = vmatpush1.msra.mxu0 %v238
  %2401 = vmatprep.subr.mxu0 0.0
  %2402 = vmatpush1.msra.mxu0 %v239
  %2403 = vmatprep.subr.mxu0 0.0
  %2404 = vmatpush1.msra.mxu0 %v240
  %2405 = vmatprep.subr.mxu0 0.0
  %2406 = vmatpush1.msra.mxu0 %v241
  %2407 = vmatprep.subr.mxu0 0.0
  %2408 = vmatpush1.msra.mxu0 0.0
  %2409 = vmatprep.subr.mxu0 0.0
  %2410 = vmatpush1.msra.mxu0 0.0
  %2411 = vmatprep.subr.mxu0 0.0
  %2412 = vmatpush1.msra.mxu0 0.0
  %2413 = vmatprep.subr.mxu0 0.0
  %2414 = vmatpush1.msra.mxu0 0.0
  %2415 = vmatprep.subr.mxu0 0.0
  %2416 = vmatpush1.msra.mxu0 0.0
  %2417 = vmatprep.subr.mxu0 0.0
  %2418 = vmatpush1.msra.mxu0 0.0
  %2419 = vmatprep.subr.mxu0 0.0
  %2420 = vmatpush1.msra.mxu0 0.0
  %2421 = vmatprep.subr.mxu0 0.0
  %2422 = vmatpush1.msra.mxu0 0.0
  %2423 = vmatprep.subr.mxu0 0.0
  %2424 = vmatpush1.msra.mxu0 0.0
  %2425 = vmatprep.subr.mxu0 0.0
  %2426 = vmatpush1.msra.mxu0 0.0
  %2427 = vmatprep.subr.mxu0 0.0
  %2428 = vmatpush1.msra.mxu0 0.0
  %2429 = vmatprep.subr.mxu0 0.0
  %2430 = vmatpush1.msra.mxu0 0.0
  %2431 = vmatprep.subr.mxu0 0.0
  %2432 = vmatpush1.msra.mxu0 0.0
  %2433 = vmatprep.subr.mxu0 0.0
  %2434 = vmatpush1.msra.mxu0 0.0
  %2435 = vmatprep.subr.mxu0 0.0
  %2436 = vmatpush1.msra.mxu0 0.0
  %2437 = vmatprep.subr.mxu0 0.0
  %2438 = vmatpush1.msra.mxu0 0.0
  %2439 = vmatprep.subr.mxu0 0.0
  %2440 = vmatpush1.msra.mxu0 0.0
  %2441 = vmatprep.subr.mxu0 0.0
  %2442 = vmatpush1.msra.mxu0 0.0
  %2443 = vmatprep.subr.mxu0 0.0
  %2444 = vmatpush1.msra.mxu0 0.0
  %2445 = vmatprep.subr.mxu0 0.0
  %2446 = vmatpush1.msra.mxu0 0.0
  %2447 = vmatprep.subr.mxu0 0.0
  %2448 = vmatpush1.msra.mxu0 0.0
  %2449 = vmatprep.subr.mxu0 0.0
  %2450 = vmatpush1.msra.mxu0 0.0
  %2451 = vmatprep.subr.mxu0 0.0
  %2452 = vmatpush1.msra.mxu0 0.0
  %2453 = vmatprep.subr.mxu0 0.0
  %2454 = vmatpush1.msra.mxu0 0.0
  %2455 = vmatprep.mubr.f32.mxu0 0.0
  %2456 = vmatmul.mubr.f32.gmra.mrb[0].mxu0 %v2389
  %v2457 = vpop.f32.mrb[0].mxu0
  %v2458 = vadd.f32 0.0, %v2457
  %v2459 = vpop.f32.mrb[0].mxu0
  %2460 = vdwg.mxu0
  %v2461 = vrot.slane %v2259, 2
  %2462 = vrot.lane.b32.xlu0 %v2461, 32
  %v2463 = vpop.permute.xlu0 %2462
  %v2464 = vsel %vm50, %v2463, 0
  %2466 = vmatprep.subr.mxu0 0.0
  %2467 = vmatpush1.msra.mxu0 %v230
  %2468 = vmatprep.subr.mxu0 0.0
  %2469 = vmatpush1.msra.mxu0 %v231
  %2470 = vmatprep.subr.mxu0 0.0
  %2471 = vmatpush1.msra.mxu0 %v232
  %2472 = vmatprep.subr.mxu0 0.0
  %2473 = vmatpush1.msra.mxu0 %v233
  %2474 = vmatprep.subr.mxu0 0.0
  %2475 = vmatpush1.msra.mxu0 0.0
  %2476 = vmatprep.subr.mxu0 0.0
  %2477 = vmatpush1.msra.mxu0 0.0
  %2478 = vmatprep.subr.mxu0 0.0
  %2479 = vmatpush1.msra.mxu0 0.0
  %2480 = vmatprep.subr.mxu0 0.0
  %2481 = vmatpush1.msra.mxu0 0.0
  %2482 = vmatprep.subr.mxu0 0.0
  %2483 = vmatpush1.msra.mxu0 0.0
  %2484 = vmatprep.subr.mxu0 0.0
  %2485 = vmatpush1.msra.mxu0 0.0
  %2486 = vmatprep.subr.mxu0 0.0
  %2487 = vmatpush1.msra.mxu0 0.0
  %2488 = vmatprep.subr.mxu0 0.0
  %2489 = vmatpush1.msra.mxu0 0.0
  %2490 = vmatprep.subr.mxu0 0.0
  %2491 = vmatpush1.msra.mxu0 0.0
  %2492 = vmatprep.subr.mxu0 0.0
  %2493 = vmatpush1.msra.mxu0 0.0
  %2494 = vmatprep.subr.mxu0 0.0
  %2495 = vmatpush1.msra.mxu0 0.0
  %2496 = vmatprep.subr.mxu0 0.0
  %2497 = vmatpush1.msra.mxu0 0.0
  %2498 = vmatprep.subr.mxu0 0.0
  %2499 = vmatpush1.msra.mxu0 0.0
  %2500 = vmatprep.subr.mxu0 0.0
  %2501 = vmatpush1.msra.mxu0 0.0
  %2502 = vmatprep.subr.mxu0 0.0
  %2503 = vmatpush1.msra.mxu0 0.0
  %2504 = vmatprep.subr.mxu0 0.0
  %2505 = vmatpush1.msra.mxu0 0.0
  %2506 = vmatprep.subr.mxu0 0.0
  %2507 = vmatpush1.msra.mxu0 0.0
  %2508 = vmatprep.subr.mxu0 0.0
  %2509 = vmatpush1.msra.mxu0 0.0
  %2510 = vmatprep.subr.mxu0 0.0
  %2511 = vmatpush1.msra.mxu0 0.0
  %2512 = vmatprep.subr.mxu0 0.0
  %2513 = vmatpush1.msra.mxu0 0.0
  %2514 = vmatprep.subr.mxu0 0.0
  %2515 = vmatpush1.msra.mxu0 0.0
  %2516 = vmatprep.subr.mxu0 0.0
  %2517 = vmatpush1.msra.mxu0 0.0
  %2518 = vmatprep.subr.mxu0 0.0
  %2519 = vmatpush1.msra.mxu0 0.0
  %2520 = vmatprep.subr.mxu0 0.0
  %2521 = vmatpush1.msra.mxu0 0.0
  %2522 = vmatprep.subr.mxu0 0.0
  %2523 = vmatpush1.msra.mxu0 0.0
  %2524 = vmatprep.subr.mxu0 0.0
  %2525 = vmatpush1.msra.mxu0 0.0
  %2526 = vmatprep.subr.mxu0 0.0
  %2527 = vmatpush1.msra.mxu0 0.0
  %2528 = vmatprep.subr.mxu0 0.0
  %2529 = vmatpush1.msra.mxu0 0.0
  %2530 = vmatprep.mubr.f32.mxu0 0.0
  %2531 = vmatmul.mubr.f32.gmra.mrb[0].mxu0 %v2464
  %v2532 = vpop.f32.mrb[0].mxu0
  %v2533 = vadd.f32 %v2458, %v2532
  %v2534 = vpop.f32.mrb[0].mxu0
  %2535 = vdwg.mxu0
  %v2536 = vtanh.pop %v2533
  %v2538 = vrot.slane %v1002, 6
  %v2541 = vrot.slane %v1386, 4
  %v2544 = vrot.slane %v1772, 2
  %v2547 = vrot.slane %v2536, 6
  %vm2549 = vcmask 1041408
  %v2550 = vsel %vm2549, %v617, %v2538
  %vm2551 = vcmask 1043456
  %v2552 = vsel %vm2551, %v2550, %v2541
  %vm2553 = vcmask 1045504
  %v2554 = vsel %vm2553, %v2552, %v2544
  %v2555 = vsel %vm2549, %v2151, %v2547
  %v2556 = vld [vmem:[%s8] sm:$0xff]
  %v2557 = vld [vmem:[%s8 + $0x8] sm:$0xff]
  %v2558 = vld [vmem:[%s8 + $0x10] sm:$0xff]
  %v2559 = vld [vmem:[%s8 + $0x18] sm:$0xff]
  %v2560 = vld [vmem:[%s9] sm:$0x1]
  %v2562 = vlaneseq
  %v2563 = vshrl.u32 %v2562, 7
  %v2564 = vsub.s32 0, %v2563
  %v2565 = vrot.slane %v2560, %v2564
  %v2568 = vsel %vm50, %v2554, 0
  %v2571 = vsel %vm50, %v2555, 0
  %2573 = vmatprep.subr.mxu0 0.0
  %2574 = vmatpush1.msra.mxu0 %v2556
  %2575 = vmatprep.subr.mxu0 0.0
  %2576 = vmatpush1.msra.mxu0 %v2557
  %2577 = vmatprep.subr.mxu0 0.0
  %2578 = vmatpush1.msra.mxu0 %v2558
  %2579 = vmatprep.subr.mxu0 0.0
  %2580 = vmatpush1.msra.mxu0 %v2559
  %2581 = vmatprep.subr.mxu0 0.0
  %2582 = vmatpush1.msra.mxu0 0.0
  %2583 = vmatprep.subr.mxu0 0.0
  %2584 = vmatpush1.msra.mxu0 0.0
  %2585 = vmatprep.subr.mxu0 0.0
  %2586 = vmatpush1.msra.mxu0 0.0
  %2587 = vmatprep.subr.mxu0 0.0
  %2588 = vmatpush1.msra.mxu0 0.0
  %2589 = vmatprep.subr.mxu0 0.0
  %2590 = vmatpush1.msra.mxu0 0.0
  %2591 = vmatprep.subr.mxu0 0.0
  %2592 = vmatpush1.msra.mxu0 0.0
  %2593 = vmatprep.subr.mxu0 0.0
  %2594 = vmatpush1.msra.mxu0 0.0
  %2595 = vmatprep.subr.mxu0 0.0
  %2596 = vmatpush1.msra.mxu0 0.0
  %2597 = vmatprep.subr.mxu0 0.0
  %2598 = vmatpush1.msra.mxu0 0.0
  %2599 = vmatprep.subr.mxu0 0.0
  %2600 = vmatpush1.msra.mxu0 0.0
  %2601 = vmatprep.subr.mxu0 0.0
  %2602 = vmatpush1.msra.mxu0 0.0
  %2603 = vmatprep.subr.mxu0 0.0
  %2604 = vmatpush1.msra.mxu0 0.0
  %2605 = vmatprep.subr.mxu0 0.0
  %2606 = vmatpush1.msra.mxu0 0.0
  %2607 = vmatprep.subr.mxu0 0.0
  %2608 = vmatpush1.msra.mxu0 0.0
  %2609 = vmatprep.subr.mxu0 0.0
  %2610 = vmatpush1.msra.mxu0 0.0
  %2611 = vmatprep.subr.mxu0 0.0
  %2612 = vmatpush1.msra.mxu0 0.0
  %2613 = vmatprep.subr.mxu0 0.0
  %2614 = vmatpush1.msra.mxu0 0.0
  %2615 = vmatprep.subr.mxu0 0.0
  %2616 = vmatpush1.msra.mxu0 0.0
  %2617 = vmatprep.subr.mxu0 0.0
  %2618 = vmatpush1.msra.mxu0 0.0
  %2619 = vmatprep.subr.mxu0 0.0
  %2620 = vmatpush1.msra.mxu0 0.0
  %2621 = vmatprep.subr.mxu0 0.0
  %2622 = vmatpush1.msra.mxu0 0.0
  %2623 = vmatprep.subr.mxu0 0.0
  %2624 = vmatpush1.msra.mxu0 0.0
  %2625 = vmatprep.subr.mxu0 0.0
  %2626 = vmatpush1.msra.mxu0 0.0
  %2627 = vmatprep.subr.mxu0 0.0
  %2628 = vmatpush1.msra.mxu0 0.0
  %2629 = vmatprep.subr.mxu0 0.0
  %2630 = vmatpush1.msra.mxu0 0.0
  %2631 = vmatprep.subr.mxu0 0.0
  %2632 = vmatpush1.msra.mxu0 0.0
  %2633 = vmatprep.subr.mxu0 0.0
  %2634 = vmatpush1.msra.mxu0 0.0
  %2635 = vmatprep.subr.mxu0 0.0
  %2636 = vmatpush1.msra.mxu0 0.0
  %2637 = vmatprep.mubr.f32.mxu0 0.0
  %2638 = vmatmul.mubr.f32.gmra.mrb[0].mxu0 %v2568
  %v2639 = vpop.f32.mrb[0].mxu0
  %v2640 = vadd.f32 %v2565, %v2639
  %v2641 = vpop.f32.mrb[0].mxu0
  %2642 = vmatprep.mubr.f32.mxu0 0.0
  %2643 = vmatmul.mubr.f32.gmra.mrb[0].mxu0 %v2571
  %v2644 = vpop.f32.mrb[0].mxu0
  %v2645 = vadd.f32 %v2565, %v2644
  %v2646 = vpop.f32.mrb[0].mxu0
  %2647 = vdwg.mxu0
  %2648 = vmax.xlane.f32.xlu0 %v2640
  %v2649 = vpop.xlane.xlu0 %2648
  %v2650 = vsel %vm2551, %v2645, -inf
  %2651 = vmax.xlane.f32.xlu0 %v2650
  %v2652 = vpop.xlane.xlu0 %2651
  %v2653 = vsub.f32 %v2640, %v2649
  %v2654 = vsub.f32 %v2645, %v2652
  %v2655 = vmul.f32 %v2653, 1.442695
  %v2656 = vpow.pop %v2655
  %v2657 = vmul.f32 %v2654, 1.442695
  %v2658 = vpow.pop %v2657
  %2659 = vadd.xlane.f32.xlu0 %v2656
  %v2660 = vpop.xlane.xlu0 %2659
  %v2661 = vsel %vm2551, %v2658, 0.0
  %2662 = vadd.xlane.f32.xlu0 %v2661
  %v2663 = vpop.xlane.xlu0 %2662
  %v2664 = vlog2.pop %v2660
  %v2665 = vmul.f32 %v2664, 0.6931472
  %v2666 = vlog2.pop %v2663
  %v2667 = vmul.f32 %v2666, 0.6931472
  %v2668 = vadd.f32 %v2649, %v2665
  %v2669 = vadd.f32 %v2652, %v2667
  %v2670 = vsub.f32 %v2640, %v2668
  %v2671 = vsub.f32 %v2645, %v2669
  %2672 = vst [vmem:[%s10] sm:$0xff] %v2670
  %2673 = vst [vmem:[%s10 + $0x8] sm:$0xf] %v2671
  // Predicated region
  $region42: #{nmt_forward.1} parent=0 // pred_check
    _
  $region43: #{nmt_forward.1} parent=0 // pred_check_branch
    %2675 = sbr.rel (0) target = $region45
  $region44: #{nmt_forward.1} parent=0 // pred_region
    _
  $region45: #{nmt_forward.1} parent=0 // pred_fallthru
    _
  // Predicated region
  $region46: #{nmt_forward.1} parent=0 // pred_check
    _
  $region47: #{nmt_forward.1} parent=0 // pred_check_branch
    %2677 = sbr.rel (0) target = $region49
  $region48: #{nmt_forward.1} parent=0 // pred_region
    _
  $region49: #{nmt_forward.1} parent=0 // pred_fallthru
    _

</llo_original>
